<compile_context>
chip_gen: v7x
topology: tpu7x:2x2x1
jax: 0.10.0
libtpu: 0.0.40
codegen_flags: <defaults>
</compile_context>

<pallas_src>
import jax
import jax.numpy as jnp
from jax.experimental import pallas as pl
from jax.experimental.pallas import tpu as pltpu


def _lstm_fc_kernel(x2d_ref,                      # (T*BP, D) bf16, time-major, batch-padded
                    w_ih1_ref, b1_ref,            # layer-1 input proj: (D,4H) bf16, (1,4H) f32
                    w_top_ref, w_bot_ref, b2_ref, # fused recurrent: (H,8H) bf16 x2, (1,4H) f32
                    w_fc_ref, b_fc_ref,           # fc (lane-padded): (H,OP) bf16, (1,OP) f32
                    out_ref):                     # (BP, OP) f32
    TB = x2d_ref.shape[0]
    H = w_top_ref.shape[0]
    H4 = 4 * H
    BP = out_ref.shape[0]
    T = TB // BP

    # ---- Hoist every weight / bias load out of the recurrence (once). ----
    w_top = w_top_ref[...]          # [W_hh1 | W_ih2]   (H, 8H) bf16
    w_bot = w_bot_ref[...]          # [  0   | W_hh2]   (H, 8H) bf16
    b2 = b2_ref[...]                # (1, 4H) f32
    w_fc = w_fc_ref[...]            # (H, OP) bf16
    b_fc = b_fc_ref[...]            # (1, OP) f32

    # ---- Layer-1 input projection for ALL timesteps: one batched MXU matmul,
    # off the serial chain, with b1 folded in. Accumulate in f32. ----
    xw = (jnp.dot(x2d_ref[...], w_ih1_ref[...],
                  preferred_element_type=jnp.float32)
          + b1_ref[...])            # (T*BP, 4H) f32

    def fused_gates(h1v, h2v):
        # [h1 | h2] @ [[W_hh1 | W_ih2], [0 | W_hh2]] as two ACCUMULATED dots:
        # no lane concatenate on the serial chain; bf16 operands, f32 acc.
        return (jnp.dot(h1v.astype(jnp.bfloat16), w_top,
                        preferred_element_type=jnp.float32)
                + jnp.dot(h2v.astype(jnp.bfloat16), w_bot,
                          preferred_element_type=jnp.float32))   # (BP, 8H) f32

    def cell(gates, c_prev):
        # One EUP sigmoid over all 4H gate lanes (i, f, o in a single pass; the
        # redundant g lanes ride along free), tanh only for g and c_new.
        # Gate order follows PyTorch: [i | f | g | o]. All f32 (v5e-safe).
        sg = jax.nn.sigmoid(gates)
        g = jnp.tanh(gates[:, 2 * H:3 * H])
        c_new = sg[:, 1 * H:2 * H] * c_prev + sg[:, 0 * H:1 * H] * g
        h_new = sg[:, 3 * H:4 * H] * jnp.tanh(c_new)
        return h_new, c_new

    zeros = jnp.zeros((BP, H), jnp.float32)       # PyTorch default h0 = c0 = 0

    # Prologue: h1_{-1}=0  =>  gates1_0 = xw[0]; no matmul on the chain yet.
    h1, c1 = cell(xw[0:BP, :], zeros)
    h2, c2 = zeros, zeros

    # Wavefront steps t = 0..T-2 (fully unrolled, T small & static): one fused
    # matmul yields layer-2 gates at t AND layer-1 gates at t+1. The two cell
    # updates are independent (c2_{t-1} and c1_t are both already available),
    # so their EUP/VPU work overlaps within the step.
    for t in range(T - 1):
        gw = fused_gates(h1, h2)                                        # (BP, 8H)
        h2, c2 = cell(gw[:, H4:] + b2, c2)                              # layer 2 @ t
        h1, c1 = cell(gw[:, :H4] + xw[(t + 1) * BP:(t + 2) * BP, :], c1)  # layer 1 @ t+1

    # Epilogue: final layer-2 step (the gates1 half of the fused result is unused).
    gw = fused_gates(h1, h2)
    h2, c2 = cell(gw[:, H4:] + b2, c2)

    # fc(out[:, -1, :]); output lanes padded to OP in the wrapper so this is a
    # lane-dense, unmasked store.
    out_ref[...] = (jnp.dot(h2.astype(jnp.bfloat16), w_fc,
                            preferred_element_type=jnp.float32)
                    + b_fc)


def fpl_forecast_forward(x, packed):
    """x: (B, T, D) float32 (batch_first, like PyTorch) -> (B, output_size)."""
    B, T, D = x.shape
    O = packed["out_features"]
    OP = packed["w_fc"].shape[1]
    BP = max(8, ((B + 7) // 8) * 8)   # pad batch to full sublane tiles

    # Time-major + batch-padded so rows [t*BP, (t+1)*BP) of the flattened input
    # are one contiguous, (8,128)-aligned (BP, D) slab per timestep.
    x_tbd = jnp.transpose(x, (1, 0, 2))                      # (T, B, D)
    x_tbd = jnp.pad(x_tbd, ((0, 0), (0, BP - B), (0, 0)))    # (T, BP, D)
    x2d = x_tbd.reshape(T * BP, D).astype(jnp.bfloat16)      # (T*BP, D) bf16

    vmem = pl.BlockSpec(memory_space=pltpu.MemorySpace.VMEM)
    out = pl.pallas_call(
        _lstm_fc_kernel,
        out_shape=jax.ShapeDtypeStruct((BP, OP), jnp.float32),
        in_specs=[vmem] * 8,
        out_specs=vmem,
    )(x2d,
      packed["w_ih1"], packed["b1"],
      packed["w_top"], packed["w_bot"], packed["b2"],
      packed["w_fc"], packed["b_fc"])
    return out[:B, :O]


def init_params(key, input_size, hidden_size, output_size):
    """PyTorch-style uniform(-1/sqrt(H), 1/sqrt(H)) init, f32, pre-transposed
    ((in,4H)/(H,4H)) so every gate computation is a row-major x @ W matmul;
    per-layer b_ih + b_hh pre-summed. Gate order [i | f | g | o]."""
    k = 1.0 / jnp.sqrt(jnp.float32(hidden_size))
    keys = jax.random.split(key, 10)

    def u(kk, shape):
        return jax.random.uniform(kk, shape, jnp.float32, minval=-k, maxval=k)

    H4 = 4 * hidden_size
    return {
        "w_ih1": u(keys[0], (input_size, H4)),
        "w_hh1": u(keys[1], (hidden_size, H4)),
        "b1":    u(keys[2], (1, H4)) + u(keys[3], (1, H4)),   # b_ih + b_hh
        "w_ih2": u(keys[4], (hidden_size, H4)),
        "w_hh2": u(keys[5], (hidden_size, H4)),
        "b2":    u(keys[6], (1, H4)) + u(keys[7], (1, H4)),
        "w_fc":  u(keys[8], (hidden_size, output_size)),
        "b_fc":  u(keys[9], (1, output_size)),
    }


def pack_params(params, lane=128):
    """Kernel-ready packing: wavefront-fused recurrent weights
    W_top=[W_hh1|W_ih2], W_bot=[0|W_hh2] (stacking done ONCE here, never per
    step), bf16 MXU operands, fc lane-padded to a multiple of 128."""
    H = params["w_hh1"].shape[0]
    H4 = 4 * H
    O = params["w_fc"].shape[1]
    OP = max(lane, ((O + lane - 1) // lane) * lane)

    w_top = jnp.concatenate([params["w_hh1"], params["w_ih2"]], axis=1)  # (H, 8H)
    w_bot = jnp.concatenate([jnp.zeros((H, H4), jnp.float32),
                             params["w_hh2"]], axis=1)                   # (H, 8H)
    w_fc = jnp.pad(params["w_fc"], ((0, 0), (0, OP - O)))
    b_fc = jnp.pad(params["b_fc"], ((0, 0), (0, OP - O)))
    return {
        "w_ih1": params["w_ih1"].astype(jnp.bfloat16),
        "b1":    params["b1"],
        "w_top": w_top.astype(jnp.bfloat16),
        "w_bot": w_bot.astype(jnp.bfloat16),
        "b2":    params["b2"],
        "w_fc":  w_fc.astype(jnp.bfloat16),
        "b_fc":  b_fc,
        "out_features": O,
    }


def _reference_forward(x, params, matmul_dtype=jnp.float32):
    """Pure-JAX reference of the PyTorch forward. With matmul_dtype=bf16 it
    mirrors the kernel's MXU-operand precision (f32 accumulation/elementwise)."""
    B, T, D = x.shape
    H = params["w_hh1"].shape[0]

    def mm(a, w):
        return jnp.dot(a.astype(matmul_dtype), w.astype(matmul_dtype),
                       preferred_element_type=jnp.float32)

    def cell(x_t, h, c, w_ih, w_hh, b):
        g = mm(x_t, w_ih) + mm(h, w_hh) + b
        i = jax.nn.sigmoid(g[:, 0 * H:1 * H])
        f = jax.nn.sigmoid(g[:, 1 * H:2 * H])
        gg = jnp.tanh(g[:, 2 * H:3 * H])
        o = jax.nn.sigmoid(g[:, 3 * H:4 * H])
        c = f * c + i * gg
        h = o * jnp.tanh(c)
        return h, c

    h1 = c1 = h2 = c2 = jnp.zeros((B, H), jnp.float32)
    for t in range(T):
        h1, c1 = cell(x[:, t, :], h1, c1,
                      params["w_ih1"], params["w_hh1"], params["b1"])
        h2, c2 = cell(h1, h2, c2,
                      params["w_ih2"], params["w_hh2"], params["b2"])
    return mm(h2, params["w_fc"]) + params["b_fc"]


if __name__ == "__main__":
    # small shapes consistent with the module's forward
    batch, seq_len, input_size = 2, 8, 8
    hidden_size, output_size = 32, 1

    key = jax.random.PRNGKey(0)
    k_x, k_p = jax.random.split(key)
    x = jax.random.normal(k_x, (batch, seq_len, input_size), jnp.float32)
    params = init_params(k_p, input_size, hidden_size, output_size)
    packed = pack_params(params)

    out = fpl_forecast_forward(x, packed)
    out = jax.block_until_ready(out)
    assert out.shape == (batch, output_size)

    # Tight check vs a reference using the same bf16 MXU-operand precision.
    ref_bf16 = _reference_forward(x, params, matmul_dtype=jnp.bfloat16)
    assert jnp.allclose(out, ref_bf16, atol=1e-3, rtol=1e-3), (out, ref_bf16)

    # Loose sanity check vs the full-f32 PyTorch-semantics reference.
    ref_f32 = _reference_forward(x, params, matmul_dtype=jnp.float32)
    assert jnp.allclose(out, ref_f32, atol=5e-2, rtol=5e-2), (out, ref_f32)

    print("KERNEL_OK")
</pallas_src>

<mosaic_0001>
module attributes {stable_mosaic.version = 11 : i64} {
  func.func @_lstm_fc_kernel(%arg0: memref<64x8xbf16, #tpu.memory_space<vmem>>, %arg1: memref<8x128xbf16, #tpu.memory_space<vmem>>, %arg2: memref<1x128xf32, #tpu.memory_space<vmem>>, %arg3: memref<32x256xbf16, #tpu.memory_space<vmem>>, %arg4: memref<32x256xbf16, #tpu.memory_space<vmem>>, %arg5: memref<1x128xf32, #tpu.memory_space<vmem>>, %arg6: memref<32x128xbf16, #tpu.memory_space<vmem>>, %arg7: memref<1x128xf32, #tpu.memory_space<vmem>>, %arg8: memref<8x128xf32, #tpu.memory_space<vmem>>) attributes {dimension_semantics = [], scalar_prefetch = 0 : i64, scratch_operands = 0 : i64, tpu.core_type = #tpu.core_type<tc>} {
    %c0 = arith.constant 0 : index
    %c0_0 = arith.constant 0 : index
    %0 = vector.load %arg3[%c0, %c0_0] : memref<32x256xbf16, #tpu.memory_space<vmem>>, vector<32x256xbf16>
    %c0_1 = arith.constant 0 : index
    %c0_2 = arith.constant 0 : index
    %1 = vector.load %arg4[%c0_1, %c0_2] : memref<32x256xbf16, #tpu.memory_space<vmem>>, vector<32x256xbf16>
    %c0_3 = arith.constant 0 : index
    %c0_4 = arith.constant 0 : index
    %2 = vector.load %arg5[%c0_3, %c0_4] : memref<1x128xf32, #tpu.memory_space<vmem>>, vector<1x128xf32>
    %c0_5 = arith.constant 0 : index
    %c0_6 = arith.constant 0 : index
    %3 = vector.load %arg6[%c0_5, %c0_6] : memref<32x128xbf16, #tpu.memory_space<vmem>>, vector<32x128xbf16>
    %c0_7 = arith.constant 0 : index
    %c0_8 = arith.constant 0 : index
    %4 = vector.load %arg7[%c0_7, %c0_8] : memref<1x128xf32, #tpu.memory_space<vmem>>, vector<1x128xf32>
    %c0_9 = arith.constant 0 : index
    %c0_10 = arith.constant 0 : index
    %5 = vector.load %arg0[%c0_9, %c0_10] : memref<64x8xbf16, #tpu.memory_space<vmem>>, vector<64x8xbf16>
    %c0_11 = arith.constant 0 : index
    %c0_12 = arith.constant 0 : index
    %6 = vector.load %arg1[%c0_11, %c0_12] : memref<8x128xbf16, #tpu.memory_space<vmem>>, vector<8x128xbf16>
    %cst = arith.constant dense<0.000000e+00> : vector<64x128xf32>
    %7 = tpu.matmul %5, %6, %cst {dimension_numbers = #tpu.dot_dimension_numbers<[1], [0], [0], [1], [0, 0, 1, 1], [], []>} : vector<64x8xbf16>, vector<8x128xbf16>, vector<64x128xf32> -> vector<64x128xf32>
    %c0_13 = arith.constant 0 : index
    %c0_14 = arith.constant 0 : index
    %8 = vector.load %arg2[%c0_13, %c0_14] : memref<1x128xf32, #tpu.memory_space<vmem>>, vector<1x128xf32>
    %9 = vector.broadcast %8 : vector<1x128xf32> to vector<64x128xf32>
    %10 = arith.addf %7, %9 : vector<64x128xf32>
    %cst_15 = arith.constant 0.000000e+00 : f32
    %11 = vector.broadcast %cst_15 : f32 to vector<8x32xf32>
    %12 = vector.extract_strided_slice %10 {offsets = [0, 0], sizes = [8, 128], strides = [1, 1]} : vector<64x128xf32> to vector<8x128xf32>
    %13 = arith.negf %12 : vector<8x128xf32>
    %14 = math.exp %13 : vector<8x128xf32>
    %cst_16 = arith.constant 1.000000e+00 : f32
    %15 = vector.broadcast %cst_16 : f32 to vector<8x128xf32>
    %16 = arith.addf %15, %14 : vector<8x128xf32>
    %17 = arith.divf %15, %16 : vector<8x128xf32>
    %18 = vector.extract_strided_slice %12 {offsets = [0, 64], sizes = [8, 32], strides = [1, 1]} : vector<8x128xf32> to vector<8x32xf32>
    %19 = math.tanh %18 : vector<8x32xf32>
    %20 = vector.extract_strided_slice %17 {offsets = [0, 32], sizes = [8, 32], strides = [1, 1]} : vector<8x128xf32> to vector<8x32xf32>
    %21 = arith.mulf %20, %11 : vector<8x32xf32>
    %22 = vector.extract_strided_slice %17 {offsets = [0, 0], sizes = [8, 32], strides = [1, 1]} : vector<8x128xf32> to vector<8x32xf32>
    %23 = arith.mulf %22, %19 : vector<8x32xf32>
    %24 = arith.addf %21, %23 : vector<8x32xf32>
    %25 = vector.extract_strided_slice %17 {offsets = [0, 96], sizes = [8, 32], strides = [1, 1]} : vector<8x128xf32> to vector<8x32xf32>
    %26 = math.tanh %24 : vector<8x32xf32>
    %27 = arith.mulf %25, %26 : vector<8x32xf32>
    %28 = arith.truncf %27 : vector<8x32xf32> to vector<8x32xbf16>
    %cst_17 = arith.constant dense<0.000000e+00> : vector<8x256xf32>
    %29 = tpu.matmul %28, %0, %cst_17 {dimension_numbers = #tpu.dot_dimension_numbers<[1], [0], [0], [1], [0, 0, 1, 1], [], []>} : vector<8x32xbf16>, vector<32x256xbf16>, vector<8x256xf32> -> vector<8x256xf32>
    %30 = arith.truncf %11 : vector<8x32xf32> to vector<8x32xbf16>
    %cst_18 = arith.constant dense<0.000000e+00> : vector<8x256xf32>
    %31 = tpu.matmul %30, %1, %cst_18 {dimension_numbers = #tpu.dot_dimension_numbers<[1], [0], [0], [1], [0, 0, 1, 1], [], []>} : vector<8x32xbf16>, vector<32x256xbf16>, vector<8x256xf32> -> vector<8x256xf32>
    %32 = arith.addf %29, %31 : vector<8x256xf32>
    %33 = vector.extract_strided_slice %32 {offsets = [0, 128], sizes = [8, 128], strides = [1, 1]} : vector<8x256xf32> to vector<8x128xf32>
    %34 = vector.broadcast %2 : vector<1x128xf32> to vector<8x128xf32>
    %35 = arith.addf %33, %34 : vector<8x128xf32>
    %36 = arith.negf %35 : vector<8x128xf32>
    %37 = math.exp %36 : vector<8x128xf32>
    %cst_19 = arith.constant 1.000000e+00 : f32
    %38 = vector.broadcast %cst_19 : f32 to vector<8x128xf32>
    %39 = arith.addf %38, %37 : vector<8x128xf32>
    %40 = arith.divf %38, %39 : vector<8x128xf32>
    %41 = vector.extract_strided_slice %35 {offsets = [0, 64], sizes = [8, 32], strides = [1, 1]} : vector<8x128xf32> to vector<8x32xf32>
    %42 = math.tanh %41 : vector<8x32xf32>
    %43 = vector.extract_strided_slice %40 {offsets = [0, 32], sizes = [8, 32], strides = [1, 1]} : vector<8x128xf32> to vector<8x32xf32>
    %44 = arith.mulf %43, %11 : vector<8x32xf32>
    %45 = vector.extract_strided_slice %40 {offsets = [0, 0], sizes = [8, 32], strides = [1, 1]} : vector<8x128xf32> to vector<8x32xf32>
    %46 = arith.mulf %45, %42 : vector<8x32xf32>
    %47 = arith.addf %44, %46 : vector<8x32xf32>
    %48 = vector.extract_strided_slice %40 {offsets = [0, 96], sizes = [8, 32], strides = [1, 1]} : vector<8x128xf32> to vector<8x32xf32>
    %49 = math.tanh %47 : vector<8x32xf32>
    %50 = arith.mulf %48, %49 : vector<8x32xf32>
    %51 = vector.extract_strided_slice %32 {offsets = [0, 0], sizes = [8, 128], strides = [1, 1]} : vector<8x256xf32> to vector<8x128xf32>
    %52 = vector.extract_strided_slice %10 {offsets = [8, 0], sizes = [8, 128], strides = [1, 1]} : vector<64x128xf32> to vector<8x128xf32>
    %53 = arith.addf %51, %52 : vector<8x128xf32>
    %54 = arith.negf %53 : vector<8x128xf32>
    %55 = math.exp %54 : vector<8x128xf32>
    %cst_20 = arith.constant 1.000000e+00 : f32
    %56 = vector.broadcast %cst_20 : f32 to vector<8x128xf32>
    %57 = arith.addf %56, %55 : vector<8x128xf32>
    %58 = arith.divf %56, %57 : vector<8x128xf32>
    %59 = vector.extract_strided_slice %53 {offsets = [0, 64], sizes = [8, 32], strides = [1, 1]} : vector<8x128xf32> to vector<8x32xf32>
    %60 = math.tanh %59 : vector<8x32xf32>
    %61 = vector.extract_strided_slice %58 {offsets = [0, 32], sizes = [8, 32], strides = [1, 1]} : vector<8x128xf32> to vector<8x32xf32>
    %62 = arith.mulf %61, %24 : vector<8x32xf32>
    %63 = vector.extract_strided_slice %58 {offsets = [0, 0], sizes = [8, 32], strides = [1, 1]} : vector<8x128xf32> to vector<8x32xf32>
    %64 = arith.mulf %63, %60 : vector<8x32xf32>
    %65 = arith.addf %62, %64 : vector<8x32xf32>
    %66 = vector.extract_strided_slice %58 {offsets = [0, 96], sizes = [8, 32], strides = [1, 1]} : vector<8x128xf32> to vector<8x32xf32>
    %67 = math.tanh %65 : vector<8x32xf32>
    %68 = arith.mulf %66, %67 : vector<8x32xf32>
    %69 = arith.truncf %68 : vector<8x32xf32> to vector<8x32xbf16>
    %cst_21 = arith.constant dense<0.000000e+00> : vector<8x256xf32>
    %70 = tpu.matmul %69, %0, %cst_21 {dimension_numbers = #tpu.dot_dimension_numbers<[1], [0], [0], [1], [0, 0, 1, 1], [], []>} : vector<8x32xbf16>, vector<32x256xbf16>, vector<8x256xf32> -> vector<8x256xf32>
    %71 = arith.truncf %50 : vector<8x32xf32> to vector<8x32xbf16>
    %cst_22 = arith.constant dense<0.000000e+00> : vector<8x256xf32>
    %72 = tpu.matmul %71, %1, %cst_22 {dimension_numbers = #tpu.dot_dimension_numbers<[1], [0], [0], [1], [0, 0, 1, 1], [], []>} : vector<8x32xbf16>, vector<32x256xbf16>, vector<8x256xf32> -> vector<8x256xf32>
    %73 = arith.addf %70, %72 : vector<8x256xf32>
    %74 = vector.extract_strided_slice %73 {offsets = [0, 128], sizes = [8, 128], strides = [1, 1]} : vector<8x256xf32> to vector<8x128xf32>
    %75 = vector.broadcast %2 : vector<1x128xf32> to vector<8x128xf32>
    %76 = arith.addf %74, %75 : vector<8x128xf32>
    %77 = arith.negf %76 : vector<8x128xf32>
    %78 = math.exp %77 : vector<8x128xf32>
    %cst_23 = arith.constant 1.000000e+00 : f32
    %79 = vector.broadcast %cst_23 : f32 to vector<8x128xf32>
    %80 = arith.addf %79, %78 : vector<8x128xf32>
    %81 = arith.divf %79, %80 : vector<8x128xf32>
    %82 = vector.extract_strided_slice %76 {offsets = [0, 64], sizes = [8, 32], strides = [1, 1]} : vector<8x128xf32> to vector<8x32xf32>
    %83 = math.tanh %82 : vector<8x32xf32>
    %84 = vector.extract_strided_slice %81 {offsets = [0, 32], sizes = [8, 32], strides = [1, 1]} : vector<8x128xf32> to vector<8x32xf32>
    %85 = arith.mulf %84, %47 : vector<8x32xf32>
    %86 = vector.extract_strided_slice %81 {offsets = [0, 0], sizes = [8, 32], strides = [1, 1]} : vector<8x128xf32> to vector<8x32xf32>
    %87 = arith.mulf %86, %83 : vector<8x32xf32>
    %88 = arith.addf %85, %87 : vector<8x32xf32>
    %89 = vector.extract_strided_slice %81 {offsets = [0, 96], sizes = [8, 32], strides = [1, 1]} : vector<8x128xf32> to vector<8x32xf32>
    %90 = math.tanh %88 : vector<8x32xf32>
    %91 = arith.mulf %89, %90 : vector<8x32xf32>
    %92 = vector.extract_strided_slice %73 {offsets = [0, 0], sizes = [8, 128], strides = [1, 1]} : vector<8x256xf32> to vector<8x128xf32>
    %93 = vector.extract_strided_slice %10 {offsets = [16, 0], sizes = [8, 128], strides = [1, 1]} : vector<64x128xf32> to vector<8x128xf32>
    %94 = arith.addf %92, %93 : vector<8x128xf32>
    %95 = arith.negf %94 : vector<8x128xf32>
    %96 = math.exp %95 : vector<8x128xf32>
    %cst_24 = arith.constant 1.000000e+00 : f32
    %97 = vector.broadcast %cst_24 : f32 to vector<8x128xf32>
    %98 = arith.addf %97, %96 : vector<8x128xf32>
    %99 = arith.divf %97, %98 : vector<8x128xf32>
    %100 = vector.extract_strided_slice %94 {offsets = [0, 64], sizes = [8, 32], strides = [1, 1]} : vector<8x128xf32> to vector<8x32xf32>
    %101 = math.tanh %100 : vector<8x32xf32>
    %102 = vector.extract_strided_slice %99 {offsets = [0, 32], sizes = [8, 32], strides = [1, 1]} : vector<8x128xf32> to vector<8x32xf32>
    %103 = arith.mulf %102, %65 : vector<8x32xf32>
    %104 = vector.extract_strided_slice %99 {offsets = [0, 0], sizes = [8, 32], strides = [1, 1]} : vector<8x128xf32> to vector<8x32xf32>
    %105 = arith.mulf %104, %101 : vector<8x32xf32>
    %106 = arith.addf %103, %105 : vector<8x32xf32>
    %107 = vector.extract_strided_slice %99 {offsets = [0, 96], sizes = [8, 32], strides = [1, 1]} : vector<8x128xf32> to vector<8x32xf32>
    %108 = math.tanh %106 : vector<8x32xf32>
    %109 = arith.mulf %107, %108 : vector<8x32xf32>
    %110 = arith.truncf %109 : vector<8x32xf32> to vector<8x32xbf16>
    %cst_25 = arith.constant dense<0.000000e+00> : vector<8x256xf32>
    %111 = tpu.matmul %110, %0, %cst_25 {dimension_numbers = #tpu.dot_dimension_numbers<[1], [0], [0], [1], [0, 0, 1, 1], [], []>} : vector<8x32xbf16>, vector<32x256xbf16>, vector<8x256xf32> -> vector<8x256xf32>
    %112 = arith.truncf %91 : vector<8x32xf32> to vector<8x32xbf16>
    %cst_26 = arith.constant dense<0.000000e+00> : vector<8x256xf32>
    %113 = tpu.matmul %112, %1, %cst_26 {dimension_numbers = #tpu.dot_dimension_numbers<[1], [0], [0], [1], [0, 0, 1, 1], [], []>} : vector<8x32xbf16>, vector<32x256xbf16>, vector<8x256xf32> -> vector<8x256xf32>
    %114 = arith.addf %111, %113 : vector<8x256xf32>
    %115 = vector.extract_strided_slice %114 {offsets = [0, 128], sizes = [8, 128], strides = [1, 1]} : vector<8x256xf32> to vector<8x128xf32>
    %116 = vector.broadcast %2 : vector<1x128xf32> to vector<8x128xf32>
    %117 = arith.addf %115, %116 : vector<8x128xf32>
    %118 = arith.negf %117 : vector<8x128xf32>
    %119 = math.exp %118 : vector<8x128xf32>
    %cst_27 = arith.constant 1.000000e+00 : f32
    %120 = vector.broadcast %cst_27 : f32 to vector<8x128xf32>
    %121 = arith.addf %120, %119 : vector<8x128xf32>
    %122 = arith.divf %120, %121 : vector<8x128xf32>
    %123 = vector.extract_strided_slice %117 {offsets = [0, 64], sizes = [8, 32], strides = [1, 1]} : vector<8x128xf32> to vector<8x32xf32>
    %124 = math.tanh %123 : vector<8x32xf32>
    %125 = vector.extract_strided_slice %122 {offsets = [0, 32], sizes = [8, 32], strides = [1, 1]} : vector<8x128xf32> to vector<8x32xf32>
    %126 = arith.mulf %125, %88 : vector<8x32xf32>
    %127 = vector.extract_strided_slice %122 {offsets = [0, 0], sizes = [8, 32], strides = [1, 1]} : vector<8x128xf32> to vector<8x32xf32>
    %128 = arith.mulf %127, %124 : vector<8x32xf32>
    %129 = arith.addf %126, %128 : vector<8x32xf32>
    %130 = vector.extract_strided_slice %122 {offsets = [0, 96], sizes = [8, 32], strides = [1, 1]} : vector<8x128xf32> to vector<8x32xf32>
    %131 = math.tanh %129 : vector<8x32xf32>
    %132 = arith.mulf %130, %131 : vector<8x32xf32>
    %133 = vector.extract_strided_slice %114 {offsets = [0, 0], sizes = [8, 128], strides = [1, 1]} : vector<8x256xf32> to vector<8x128xf32>
    %134 = vector.extract_strided_slice %10 {offsets = [24, 0], sizes = [8, 128], strides = [1, 1]} : vector<64x128xf32> to vector<8x128xf32>
    %135 = arith.addf %133, %134 : vector<8x128xf32>
    %136 = arith.negf %135 : vector<8x128xf32>
    %137 = math.exp %136 : vector<8x128xf32>
    %cst_28 = arith.constant 1.000000e+00 : f32
    %138 = vector.broadcast %cst_28 : f32 to vector<8x128xf32>
    %139 = arith.addf %138, %137 : vector<8x128xf32>
    %140 = arith.divf %138, %139 : vector<8x128xf32>
    %141 = vector.extract_strided_slice %135 {offsets = [0, 64], sizes = [8, 32], strides = [1, 1]} : vector<8x128xf32> to vector<8x32xf32>
    %142 = math.tanh %141 : vector<8x32xf32>
    %143 = vector.extract_strided_slice %140 {offsets = [0, 32], sizes = [8, 32], strides = [1, 1]} : vector<8x128xf32> to vector<8x32xf32>
    %144 = arith.mulf %143, %106 : vector<8x32xf32>
    %145 = vector.extract_strided_slice %140 {offsets = [0, 0], sizes = [8, 32], strides = [1, 1]} : vector<8x128xf32> to vector<8x32xf32>
    %146 = arith.mulf %145, %142 : vector<8x32xf32>
    %147 = arith.addf %144, %146 : vector<8x32xf32>
    %148 = vector.extract_strided_slice %140 {offsets = [0, 96], sizes = [8, 32], strides = [1, 1]} : vector<8x128xf32> to vector<8x32xf32>
    %149 = math.tanh %147 : vector<8x32xf32>
    %150 = arith.mulf %148, %149 : vector<8x32xf32>
    %151 = arith.truncf %150 : vector<8x32xf32> to vector<8x32xbf16>
    %cst_29 = arith.constant dense<0.000000e+00> : vector<8x256xf32>
    %152 = tpu.matmul %151, %0, %cst_29 {dimension_numbers = #tpu.dot_dimension_numbers<[1], [0], [0], [1], [0, 0, 1, 1], [], []>} : vector<8x32xbf16>, vector<32x256xbf16>, vector<8x256xf32> -> vector<8x256xf32>
    %153 = arith.truncf %132 : vector<8x32xf32> to vector<8x32xbf16>
    %cst_30 = arith.constant dense<0.000000e+00> : vector<8x256xf32>
    %154 = tpu.matmul %153, %1, %cst_30 {dimension_numbers = #tpu.dot_dimension_numbers<[1], [0], [0], [1], [0, 0, 1, 1], [], []>} : vector<8x32xbf16>, vector<32x256xbf16>, vector<8x256xf32> -> vector<8x256xf32>
    %155 = arith.addf %152, %154 : vector<8x256xf32>
    %156 = vector.extract_strided_slice %155 {offsets = [0, 128], sizes = [8, 128], strides = [1, 1]} : vector<8x256xf32> to vector<8x128xf32>
    %157 = vector.broadcast %2 : vector<1x128xf32> to vector<8x128xf32>
    %158 = arith.addf %156, %157 : vector<8x128xf32>
    %159 = arith.negf %158 : vector<8x128xf32>
    %160 = math.exp %159 : vector<8x128xf32>
    %cst_31 = arith.constant 1.000000e+00 : f32
    %161 = vector.broadcast %cst_31 : f32 to vector<8x128xf32>
    %162 = arith.addf %161, %160 : vector<8x128xf32>
    %163 = arith.divf %161, %162 : vector<8x128xf32>
    %164 = vector.extract_strided_slice %158 {offsets = [0, 64], sizes = [8, 32], strides = [1, 1]} : vector<8x128xf32> to vector<8x32xf32>
    %165 = math.tanh %164 : vector<8x32xf32>
    %166 = vector.extract_strided_slice %163 {offsets = [0, 32], sizes = [8, 32], strides = [1, 1]} : vector<8x128xf32> to vector<8x32xf32>
    %167 = arith.mulf %166, %129 : vector<8x32xf32>
    %168 = vector.extract_strided_slice %163 {offsets = [0, 0], sizes = [8, 32], strides = [1, 1]} : vector<8x128xf32> to vector<8x32xf32>
    %169 = arith.mulf %168, %165 : vector<8x32xf32>
    %170 = arith.addf %167, %169 : vector<8x32xf32>
    %171 = vector.extract_strided_slice %163 {offsets = [0, 96], sizes = [8, 32], strides = [1, 1]} : vector<8x128xf32> to vector<8x32xf32>
    %172 = math.tanh %170 : vector<8x32xf32>
    %173 = arith.mulf %171, %172 : vector<8x32xf32>
    %174 = vector.extract_strided_slice %155 {offsets = [0, 0], sizes = [8, 128], strides = [1, 1]} : vector<8x256xf32> to vector<8x128xf32>
    %175 = vector.extract_strided_slice %10 {offsets = [32, 0], sizes = [8, 128], strides = [1, 1]} : vector<64x128xf32> to vector<8x128xf32>
    %176 = arith.addf %174, %175 : vector<8x128xf32>
    %177 = arith.negf %176 : vector<8x128xf32>
    %178 = math.exp %177 : vector<8x128xf32>
    %cst_32 = arith.constant 1.000000e+00 : f32
    %179 = vector.broadcast %cst_32 : f32 to vector<8x128xf32>
    %180 = arith.addf %179, %178 : vector<8x128xf32>
    %181 = arith.divf %179, %180 : vector<8x128xf32>
    %182 = vector.extract_strided_slice %176 {offsets = [0, 64], sizes = [8, 32], strides = [1, 1]} : vector<8x128xf32> to vector<8x32xf32>
    %183 = math.tanh %182 : vector<8x32xf32>
    %184 = vector.extract_strided_slice %181 {offsets = [0, 32], sizes = [8, 32], strides = [1, 1]} : vector<8x128xf32> to vector<8x32xf32>
    %185 = arith.mulf %184, %147 : vector<8x32xf32>
    %186 = vector.extract_strided_slice %181 {offsets = [0, 0], sizes = [8, 32], strides = [1, 1]} : vector<8x128xf32> to vector<8x32xf32>
    %187 = arith.mulf %186, %183 : vector<8x32xf32>
    %188 = arith.addf %185, %187 : vector<8x32xf32>
    %189 = vector.extract_strided_slice %181 {offsets = [0, 96], sizes = [8, 32], strides = [1, 1]} : vector<8x128xf32> to vector<8x32xf32>
    %190 = math.tanh %188 : vector<8x32xf32>
    %191 = arith.mulf %189, %190 : vector<8x32xf32>
    %192 = arith.truncf %191 : vector<8x32xf32> to vector<8x32xbf16>
    %cst_33 = arith.constant dense<0.000000e+00> : vector<8x256xf32>
    %193 = tpu.matmul %192, %0, %cst_33 {dimension_numbers = #tpu.dot_dimension_numbers<[1], [0], [0], [1], [0, 0, 1, 1], [], []>} : vector<8x32xbf16>, vector<32x256xbf16>, vector<8x256xf32> -> vector<8x256xf32>
    %194 = arith.truncf %173 : vector<8x32xf32> to vector<8x32xbf16>
    %cst_34 = arith.constant dense<0.000000e+00> : vector<8x256xf32>
    %195 = tpu.matmul %194, %1, %cst_34 {dimension_numbers = #tpu.dot_dimension_numbers<[1], [0], [0], [1], [0, 0, 1, 1], [], []>} : vector<8x32xbf16>, vector<32x256xbf16>, vector<8x256xf32> -> vector<8x256xf32>
    %196 = arith.addf %193, %195 : vector<8x256xf32>
    %197 = vector.extract_strided_slice %196 {offsets = [0, 128], sizes = [8, 128], strides = [1, 1]} : vector<8x256xf32> to vector<8x128xf32>
    %198 = vector.broadcast %2 : vector<1x128xf32> to vector<8x128xf32>
    %199 = arith.addf %197, %198 : vector<8x128xf32>
    %200 = arith.negf %199 : vector<8x128xf32>
    %201 = math.exp %200 : vector<8x128xf32>
    %cst_35 = arith.constant 1.000000e+00 : f32
    %202 = vector.broadcast %cst_35 : f32 to vector<8x128xf32>
    %203 = arith.addf %202, %201 : vector<8x128xf32>
    %204 = arith.divf %202, %203 : vector<8x128xf32>
    %205 = vector.extract_strided_slice %199 {offsets = [0, 64], sizes = [8, 32], strides = [1, 1]} : vector<8x128xf32> to vector<8x32xf32>
    %206 = math.tanh %205 : vector<8x32xf32>
    %207 = vector.extract_strided_slice %204 {offsets = [0, 32], sizes = [8, 32], strides = [1, 1]} : vector<8x128xf32> to vector<8x32xf32>
    %208 = arith.mulf %207, %170 : vector<8x32xf32>
    %209 = vector.extract_strided_slice %204 {offsets = [0, 0], sizes = [8, 32], strides = [1, 1]} : vector<8x128xf32> to vector<8x32xf32>
    %210 = arith.mulf %209, %206 : vector<8x32xf32>
    %211 = arith.addf %208, %210 : vector<8x32xf32>
    %212 = vector.extract_strided_slice %204 {offsets = [0, 96], sizes = [8, 32], strides = [1, 1]} : vector<8x128xf32> to vector<8x32xf32>
    %213 = math.tanh %211 : vector<8x32xf32>
    %214 = arith.mulf %212, %213 : vector<8x32xf32>
    %215 = vector.extract_strided_slice %196 {offsets = [0, 0], sizes = [8, 128], strides = [1, 1]} : vector<8x256xf32> to vector<8x128xf32>
    %216 = vector.extract_strided_slice %10 {offsets = [40, 0], sizes = [8, 128], strides = [1, 1]} : vector<64x128xf32> to vector<8x128xf32>
    %217 = arith.addf %215, %216 : vector<8x128xf32>
    %218 = arith.negf %217 : vector<8x128xf32>
    %219 = math.exp %218 : vector<8x128xf32>
    %cst_36 = arith.constant 1.000000e+00 : f32
    %220 = vector.broadcast %cst_36 : f32 to vector<8x128xf32>
    %221 = arith.addf %220, %219 : vector<8x128xf32>
    %222 = arith.divf %220, %221 : vector<8x128xf32>
    %223 = vector.extract_strided_slice %217 {offsets = [0, 64], sizes = [8, 32], strides = [1, 1]} : vector<8x128xf32> to vector<8x32xf32>
    %224 = math.tanh %223 : vector<8x32xf32>
    %225 = vector.extract_strided_slice %222 {offsets = [0, 32], sizes = [8, 32], strides = [1, 1]} : vector<8x128xf32> to vector<8x32xf32>
    %226 = arith.mulf %225, %188 : vector<8x32xf32>
    %227 = vector.extract_strided_slice %222 {offsets = [0, 0], sizes = [8, 32], strides = [1, 1]} : vector<8x128xf32> to vector<8x32xf32>
    %228 = arith.mulf %227, %224 : vector<8x32xf32>
    %229 = arith.addf %226, %228 : vector<8x32xf32>
    %230 = vector.extract_strided_slice %222 {offsets = [0, 96], sizes = [8, 32], strides = [1, 1]} : vector<8x128xf32> to vector<8x32xf32>
    %231 = math.tanh %229 : vector<8x32xf32>
    %232 = arith.mulf %230, %231 : vector<8x32xf32>
    %233 = arith.truncf %232 : vector<8x32xf32> to vector<8x32xbf16>
    %cst_37 = arith.constant dense<0.000000e+00> : vector<8x256xf32>
    %234 = tpu.matmul %233, %0, %cst_37 {dimension_numbers = #tpu.dot_dimension_numbers<[1], [0], [0], [1], [0, 0, 1, 1], [], []>} : vector<8x32xbf16>, vector<32x256xbf16>, vector<8x256xf32> -> vector<8x256xf32>
    %235 = arith.truncf %214 : vector<8x32xf32> to vector<8x32xbf16>
    %cst_38 = arith.constant dense<0.000000e+00> : vector<8x256xf32>
    %236 = tpu.matmul %235, %1, %cst_38 {dimension_numbers = #tpu.dot_dimension_numbers<[1], [0], [0], [1], [0, 0, 1, 1], [], []>} : vector<8x32xbf16>, vector<32x256xbf16>, vector<8x256xf32> -> vector<8x256xf32>
    %237 = arith.addf %234, %236 : vector<8x256xf32>
    %238 = vector.extract_strided_slice %237 {offsets = [0, 128], sizes = [8, 128], strides = [1, 1]} : vector<8x256xf32> to vector<8x128xf32>
    %239 = vector.broadcast %2 : vector<1x128xf32> to vector<8x128xf32>
    %240 = arith.addf %238, %239 : vector<8x128xf32>
    %241 = arith.negf %240 : vector<8x128xf32>
    %242 = math.exp %241 : vector<8x128xf32>
    %cst_39 = arith.constant 1.000000e+00 : f32
    %243 = vector.broadcast %cst_39 : f32 to vector<8x128xf32>
    %244 = arith.addf %243, %242 : vector<8x128xf32>
    %245 = arith.divf %243, %244 : vector<8x128xf32>
    %246 = vector.extract_strided_slice %240 {offsets = [0, 64], sizes = [8, 32], strides = [1, 1]} : vector<8x128xf32> to vector<8x32xf32>
    %247 = math.tanh %246 : vector<8x32xf32>
    %248 = vector.extract_strided_slice %245 {offsets = [0, 32], sizes = [8, 32], strides = [1, 1]} : vector<8x128xf32> to vector<8x32xf32>
    %249 = arith.mulf %248, %211 : vector<8x32xf32>
    %250 = vector.extract_strided_slice %245 {offsets = [0, 0], sizes = [8, 32], strides = [1, 1]} : vector<8x128xf32> to vector<8x32xf32>
    %251 = arith.mulf %250, %247 : vector<8x32xf32>
    %252 = arith.addf %249, %251 : vector<8x32xf32>
    %253 = vector.extract_strided_slice %245 {offsets = [0, 96], sizes = [8, 32], strides = [1, 1]} : vector<8x128xf32> to vector<8x32xf32>
    %254 = math.tanh %252 : vector<8x32xf32>
    %255 = arith.mulf %253, %254 : vector<8x32xf32>
    %256 = vector.extract_strided_slice %237 {offsets = [0, 0], sizes = [8, 128], strides = [1, 1]} : vector<8x256xf32> to vector<8x128xf32>
    %257 = vector.extract_strided_slice %10 {offsets = [48, 0], sizes = [8, 128], strides = [1, 1]} : vector<64x128xf32> to vector<8x128xf32>
    %258 = arith.addf %256, %257 : vector<8x128xf32>
    %259 = arith.negf %258 : vector<8x128xf32>
    %260 = math.exp %259 : vector<8x128xf32>
    %cst_40 = arith.constant 1.000000e+00 : f32
    %261 = vector.broadcast %cst_40 : f32 to vector<8x128xf32>
    %262 = arith.addf %261, %260 : vector<8x128xf32>
    %263 = arith.divf %261, %262 : vector<8x128xf32>
    %264 = vector.extract_strided_slice %258 {offsets = [0, 64], sizes = [8, 32], strides = [1, 1]} : vector<8x128xf32> to vector<8x32xf32>
    %265 = math.tanh %264 : vector<8x32xf32>
    %266 = vector.extract_strided_slice %263 {offsets = [0, 32], sizes = [8, 32], strides = [1, 1]} : vector<8x128xf32> to vector<8x32xf32>
    %267 = arith.mulf %266, %229 : vector<8x32xf32>
    %268 = vector.extract_strided_slice %263 {offsets = [0, 0], sizes = [8, 32], strides = [1, 1]} : vector<8x128xf32> to vector<8x32xf32>
    %269 = arith.mulf %268, %265 : vector<8x32xf32>
    %270 = arith.addf %267, %269 : vector<8x32xf32>
    %271 = vector.extract_strided_slice %263 {offsets = [0, 96], sizes = [8, 32], strides = [1, 1]} : vector<8x128xf32> to vector<8x32xf32>
    %272 = math.tanh %270 : vector<8x32xf32>
    %273 = arith.mulf %271, %272 : vector<8x32xf32>
    %274 = arith.truncf %273 : vector<8x32xf32> to vector<8x32xbf16>
    %cst_41 = arith.constant dense<0.000000e+00> : vector<8x256xf32>
    %275 = tpu.matmul %274, %0, %cst_41 {dimension_numbers = #tpu.dot_dimension_numbers<[1], [0], [0], [1], [0, 0, 1, 1], [], []>} : vector<8x32xbf16>, vector<32x256xbf16>, vector<8x256xf32> -> vector<8x256xf32>
    %276 = arith.truncf %255 : vector<8x32xf32> to vector<8x32xbf16>
    %cst_42 = arith.constant dense<0.000000e+00> : vector<8x256xf32>
    %277 = tpu.matmul %276, %1, %cst_42 {dimension_numbers = #tpu.dot_dimension_numbers<[1], [0], [0], [1], [0, 0, 1, 1], [], []>} : vector<8x32xbf16>, vector<32x256xbf16>, vector<8x256xf32> -> vector<8x256xf32>
    %278 = arith.addf %275, %277 : vector<8x256xf32>
    %279 = vector.extract_strided_slice %278 {offsets = [0, 128], sizes = [8, 128], strides = [1, 1]} : vector<8x256xf32> to vector<8x128xf32>
    %280 = vector.broadcast %2 : vector<1x128xf32> to vector<8x128xf32>
    %281 = arith.addf %279, %280 : vector<8x128xf32>
    %282 = arith.negf %281 : vector<8x128xf32>
    %283 = math.exp %282 : vector<8x128xf32>
    %cst_43 = arith.constant 1.000000e+00 : f32
    %284 = vector.broadcast %cst_43 : f32 to vector<8x128xf32>
    %285 = arith.addf %284, %283 : vector<8x128xf32>
    %286 = arith.divf %284, %285 : vector<8x128xf32>
    %287 = vector.extract_strided_slice %281 {offsets = [0, 64], sizes = [8, 32], strides = [1, 1]} : vector<8x128xf32> to vector<8x32xf32>
    %288 = math.tanh %287 : vector<8x32xf32>
    %289 = vector.extract_strided_slice %286 {offsets = [0, 32], sizes = [8, 32], strides = [1, 1]} : vector<8x128xf32> to vector<8x32xf32>
    %290 = arith.mulf %289, %252 : vector<8x32xf32>
    %291 = vector.extract_strided_slice %286 {offsets = [0, 0], sizes = [8, 32], strides = [1, 1]} : vector<8x128xf32> to vector<8x32xf32>
    %292 = arith.mulf %291, %288 : vector<8x32xf32>
    %293 = arith.addf %290, %292 : vector<8x32xf32>
    %294 = vector.extract_strided_slice %286 {offsets = [0, 96], sizes = [8, 32], strides = [1, 1]} : vector<8x128xf32> to vector<8x32xf32>
    %295 = math.tanh %293 : vector<8x32xf32>
    %296 = arith.mulf %294, %295 : vector<8x32xf32>
    %297 = vector.extract_strided_slice %278 {offsets = [0, 0], sizes = [8, 128], strides = [1, 1]} : vector<8x256xf32> to vector<8x128xf32>
    %298 = vector.extract_strided_slice %10 {offsets = [56, 0], sizes = [8, 128], strides = [1, 1]} : vector<64x128xf32> to vector<8x128xf32>
    %299 = arith.addf %297, %298 : vector<8x128xf32>
    %300 = arith.negf %299 : vector<8x128xf32>
    %301 = math.exp %300 : vector<8x128xf32>
    %cst_44 = arith.constant 1.000000e+00 : f32
    %302 = vector.broadcast %cst_44 : f32 to vector<8x128xf32>
    %303 = arith.addf %302, %301 : vector<8x128xf32>
    %304 = arith.divf %302, %303 : vector<8x128xf32>
    %305 = vector.extract_strided_slice %299 {offsets = [0, 64], sizes = [8, 32], strides = [1, 1]} : vector<8x128xf32> to vector<8x32xf32>
    %306 = math.tanh %305 : vector<8x32xf32>
    %307 = vector.extract_strided_slice %304 {offsets = [0, 32], sizes = [8, 32], strides = [1, 1]} : vector<8x128xf32> to vector<8x32xf32>
    %308 = arith.mulf %307, %270 : vector<8x32xf32>
    %309 = vector.extract_strided_slice %304 {offsets = [0, 0], sizes = [8, 32], strides = [1, 1]} : vector<8x128xf32> to vector<8x32xf32>
    %310 = arith.mulf %309, %306 : vector<8x32xf32>
    %311 = arith.addf %308, %310 : vector<8x32xf32>
    %312 = vector.extract_strided_slice %304 {offsets = [0, 96], sizes = [8, 32], strides = [1, 1]} : vector<8x128xf32> to vector<8x32xf32>
    %313 = math.tanh %311 : vector<8x32xf32>
    %314 = arith.mulf %312, %313 : vector<8x32xf32>
    %315 = arith.truncf %314 : vector<8x32xf32> to vector<8x32xbf16>
    %cst_45 = arith.constant dense<0.000000e+00> : vector<8x256xf32>
    %316 = tpu.matmul %315, %0, %cst_45 {dimension_numbers = #tpu.dot_dimension_numbers<[1], [0], [0], [1], [0, 0, 1, 1], [], []>} : vector<8x32xbf16>, vector<32x256xbf16>, vector<8x256xf32> -> vector<8x256xf32>
    %317 = arith.truncf %296 : vector<8x32xf32> to vector<8x32xbf16>
    %cst_46 = arith.constant dense<0.000000e+00> : vector<8x256xf32>
    %318 = tpu.matmul %317, %1, %cst_46 {dimension_numbers = #tpu.dot_dimension_numbers<[1], [0], [0], [1], [0, 0, 1, 1], [], []>} : vector<8x32xbf16>, vector<32x256xbf16>, vector<8x256xf32> -> vector<8x256xf32>
    %319 = arith.addf %316, %318 : vector<8x256xf32>
    %320 = vector.extract_strided_slice %319 {offsets = [0, 128], sizes = [8, 128], strides = [1, 1]} : vector<8x256xf32> to vector<8x128xf32>
    %321 = vector.broadcast %2 : vector<1x128xf32> to vector<8x128xf32>
    %322 = arith.addf %320, %321 : vector<8x128xf32>
    %323 = arith.negf %322 : vector<8x128xf32>
    %324 = math.exp %323 : vector<8x128xf32>
    %cst_47 = arith.constant 1.000000e+00 : f32
    %325 = vector.broadcast %cst_47 : f32 to vector<8x128xf32>
    %326 = arith.addf %325, %324 : vector<8x128xf32>
    %327 = arith.divf %325, %326 : vector<8x128xf32>
    %328 = vector.extract_strided_slice %322 {offsets = [0, 64], sizes = [8, 32], strides = [1, 1]} : vector<8x128xf32> to vector<8x32xf32>
    %329 = math.tanh %328 : vector<8x32xf32>
    %330 = vector.extract_strided_slice %327 {offsets = [0, 32], sizes = [8, 32], strides = [1, 1]} : vector<8x128xf32> to vector<8x32xf32>
    %331 = arith.mulf %330, %293 : vector<8x32xf32>
    %332 = vector.extract_strided_slice %327 {offsets = [0, 0], sizes = [8, 32], strides = [1, 1]} : vector<8x128xf32> to vector<8x32xf32>
    %333 = arith.mulf %332, %329 : vector<8x32xf32>
    %334 = arith.addf %331, %333 : vector<8x32xf32>
    %335 = vector.extract_strided_slice %327 {offsets = [0, 96], sizes = [8, 32], strides = [1, 1]} : vector<8x128xf32> to vector<8x32xf32>
    %336 = math.tanh %334 : vector<8x32xf32>
    %337 = arith.mulf %335, %336 : vector<8x32xf32>
    %338 = arith.truncf %337 : vector<8x32xf32> to vector<8x32xbf16>
    %cst_48 = arith.constant dense<0.000000e+00> : vector<8x128xf32>
    %339 = tpu.matmul %338, %3, %cst_48 {dimension_numbers = #tpu.dot_dimension_numbers<[1], [0], [0], [1], [0, 0, 1, 1], [], []>} : vector<8x32xbf16>, vector<32x128xbf16>, vector<8x128xf32> -> vector<8x128xf32>
    %340 = vector.broadcast %4 : vector<1x128xf32> to vector<8x128xf32>
    %341 = arith.addf %339, %340 : vector<8x128xf32>
    %c0_49 = arith.constant 0 : index
    %c0_50 = arith.constant 0 : index
    %342 = vector.load %arg8[%c0_49, %c0_50] : memref<8x128xf32, #tpu.memory_space<vmem>>, vector<8x128xf32>
    tpu.vector_store %arg8[%c0_49, %c0_50], %341 {strides = array<i32>} : memref<8x128xf32, #tpu.memory_space<vmem>>, vector<8x128xf32>,
    return
  }
}

</mosaic_0001>

<llo_original>
// kernel: tpu_custom_call.1
$region0: #{tpu_custom_call.1}
  #allocation0 [shape = 'u32[]', space=smem, size = 0x4, offset = 0x4, fixed_abs, tag = 'smem constant byte address 0x4 - core index']
  #allocation1 [shape = 'u32[144,128]{1,0:T(1,128)}', space=vmem, size = 0x12000, scoped, tag = 'internal scratch']
  %s0 = inlined_call_operand.vmem [shape: bf16[64,8], index: 0, kind: input, shape index: {}]
  %s1 = inlined_call_operand.hbm [shape: bf16[8,128], index: 1, kind: input, shape index: {}]
  %s2 = inlined_call_operand.vmem [shape: f32[1,128], index: 2, kind: input, shape index: {}]
  %s3 = inlined_call_operand.vmem [shape: bf16[32,256], index: 3, kind: input, shape index: {}]
  %s4 = inlined_call_operand.hbm [shape: bf16[32,256], index: 4, kind: input, shape index: {}]
  %s5 = inlined_call_operand.vmem [shape: f32[1,128], index: 5, kind: input, shape index: {}]
  %s6 = inlined_call_operand.vmem [shape: bf16[32,128], index: 6, kind: input, shape index: {}]
  %s7 = inlined_call_operand.vmem [shape: f32[1,128], index: 7, kind: input, shape index: {}]
  %s8 = inlined_call_operand.hbm [shape: f32[8,128], index: 8, kind: output, shape index: {}]
  %s9 = sld [smem:[#allocation0]]
  $region50: #{tpu_custom_call.1} parent=0
    _
  %s11 = ssub.s32 1, %s9
  %s12 = scalar_select 0, %s11, %s9
  $region1: #{tpu_custom_call.1} parent=0
    #allocation2 [shape = 'u8[2048]{0}', space=vmem, size = 0x800, scoped, tag = 'input window, operand 1, single buffered']
    #allocation3 [shape = 's32[1]{0}', space=sflag, size = 0x4, scoped, tag = 'scoped memory for tpu_custom_call.1']
    #allocation4 [shape = 's32[1]{0}', space=sflag, size = 0x4, scoped, tag = 'scoped memory for tpu_custom_call.1']
    #allocation5 [shape = 'u8[16384]{0}', space=vmem, size = 0x4000, scoped, tag = 'input window, operand 4, single buffered']
    #allocation6 [shape = 's32[1]{0}', space=sflag, size = 0x4, scoped, tag = 'scoped memory for tpu_custom_call.1']
    #allocation7 [shape = 'u8[4096]{0}', space=vmem, size = 0x1000, scoped, tag = 'output window, operand 0, single buffered']
    %13 = vsyncpa [#allocation3], 0
    %14 = vsyncpa [#allocation6], 0
    %15 = vsyncpa [#allocation4], 0
    // Predicated region
    $region2: #{tpu_custom_call.1} parent=1 // pred_check
      _
    $region3: #{tpu_custom_call.1} parent=1 // pred_check_branch
      %17 = sbr.rel (0) target = $region5
    $region4: #{tpu_custom_call.1} parent=1 // pred_region
      _
    $region5: #{tpu_custom_call.1} parent=1 // pred_fallthru
      _
    // Predicated region
    $region6: #{tpu_custom_call.1} parent=1 // pred_check
      _
    $region7: #{tpu_custom_call.1} parent=1 // pred_check_branch
      %19 = sbr.rel (0) target = $region9
    $region8: #{tpu_custom_call.1} parent=1 // pred_region
      %s21 = ssub.s32 64, 64
      %22 = vsyncadd [#allocation3], %s21
      %s24 = sshll.u32 [#allocation2], 4
      %s25 = int_to_ptr.vmem [resolvable:$true] %s24
      %27 = dma.hbm_to_vmem [thread:$0]  %s1, 64, %s25, [#allocation3]
    $region9: #{tpu_custom_call.1} parent=1 // pred_fallthru
      _
    // Predicated region
    $region10: #{tpu_custom_call.1} parent=1 // pred_check
      _
    $region11: #{tpu_custom_call.1} parent=1 // pred_check_branch
      %29 = sbr.rel (0) target = $region13
    $region12: #{tpu_custom_call.1} parent=1 // pred_region
      _
    $region13: #{tpu_custom_call.1} parent=1 // pred_fallthru
      _
    // Predicated region
    $region14: #{tpu_custom_call.1} parent=1 // pred_check
      _
    $region15: #{tpu_custom_call.1} parent=1 // pred_check_branch
      %31 = sbr.rel (0) target = $region17
    $region16: #{tpu_custom_call.1} parent=1 // pred_region
      _
    $region17: #{tpu_custom_call.1} parent=1 // pred_fallthru
      _
    // Predicated region
    $region18: #{tpu_custom_call.1} parent=1 // pred_check
      _
    $region19: #{tpu_custom_call.1} parent=1 // pred_check_branch
      %33 = sbr.rel (0) target = $region21
    $region20: #{tpu_custom_call.1} parent=1 // pred_region
      %s35 = ssub.s32 512, 512
      %36 = vsyncadd [#allocation6], %s35
      %s37 = sshll.u32 [#allocation5], 4
      %s38 = int_to_ptr.vmem [resolvable:$true] %s37
      %43 = dma.hbm_to_vmem [thread:$0]  %s4, 512, %s38, [#allocation6], 128, 128, 8
    $region21: #{tpu_custom_call.1} parent=1 // pred_fallthru
      _
    // Predicated region
    $region22: #{tpu_custom_call.1} parent=1 // pred_check
      _
    $region23: #{tpu_custom_call.1} parent=1 // pred_check_branch
      %45 = sbr.rel (0) target = $region25
    $region24: #{tpu_custom_call.1} parent=1 // pred_region
      _
    $region25: #{tpu_custom_call.1} parent=1 // pred_fallthru
      _
    // Predicated region
    $region26: #{tpu_custom_call.1} parent=1 // pred_check
      _
    $region27: #{tpu_custom_call.1} parent=1 // pred_check_branch
      %47 = sbr.rel (0) target = $region29
    $region28: #{tpu_custom_call.1} parent=1 // pred_region
      _
    $region29: #{tpu_custom_call.1} parent=1 // pred_fallthru
      _
    // Predicated region
    $region30: #{tpu_custom_call.1} parent=1 // pred_check
      _
    $region31: #{tpu_custom_call.1} parent=1 // pred_check_branch
      %49 = sbr.rel (0) target = $region33
    $region32: #{tpu_custom_call.1} parent=1 // pred_region
      _
    $region33: #{tpu_custom_call.1} parent=1 // pred_fallthru
      _
    // Predicated region
    $region34: #{tpu_custom_call.1} parent=1 // pred_check
      _
    $region35: #{tpu_custom_call.1} parent=1 // pred_check_branch
      %51 = sbr.rel (0) target = $region37
    $region36: #{tpu_custom_call.1} parent=1 // pred_region
      %52 = dma.done [#allocation3], 64
    $region37: #{tpu_custom_call.1} parent=1 // pred_fallthru
      _
    // Predicated region
    $region38: #{tpu_custom_call.1} parent=1 // pred_check
      _
    $region39: #{tpu_custom_call.1} parent=1 // pred_check_branch
      %54 = sbr.rel (0) target = $region41
    $region40: #{tpu_custom_call.1} parent=1 // pred_region
      %55 = dma.done [#allocation6], 512
    $region41: #{tpu_custom_call.1} parent=1 // pred_fallthru
      _
    %v57 = vld [vmem:[%s3] sm:$0xff]
    %v58 = vld [vmem:[%s3 + $0x8] sm:$0xff]
    %v59 = vld [vmem:[%s3 + $0x10] sm:$0xff]
    %v60 = vld [vmem:[%s3 + $0x18] sm:$0xff]
    %v61 = vld [vmem:[#allocation5] sm:$0xff]
    %v62 = vld [vmem:[#allocation5 + $0x8] sm:$0xff]
    %v63 = vld [vmem:[#allocation5 + $0x10] sm:$0xff]
    %v64 = vld [vmem:[#allocation5 + $0x18] sm:$0xff]
    %v65 = vld [vmem:[%s5] sm:$0x1]
    %v66 = vld [vmem:[%s6] sm:$0xf]
    %v67 = vld [vmem:[%s6 + $0x4] sm:$0xf]
    %v68 = vld [vmem:[%s6 + $0x8] sm:$0xf]
    %v69 = vld [vmem:[%s6 + $0xc] sm:$0xf]
    %v70 = vld [vmem:[%s7] sm:$0x1]
    %v71 = vld [vmem:[%s0] sm:$0xf]
    %v72 = vld [vmem:[%s0 + $0x4] sm:$0xf]
    %v73 = vld [vmem:[%s0 + $0x8] sm:$0xf]
    %v74 = vld [vmem:[%s0 + $0xc] sm:$0xf]
    %v75 = vld [vmem:[%s0 + $0x10] sm:$0xf]
    %v76 = vld [vmem:[%s0 + $0x14] sm:$0xf]
    %v77 = vld [vmem:[%s0 + $0x18] sm:$0xf]
    %v78 = vld [vmem:[%s0 + $0x1c] sm:$0xf]
    %v79 = vld [vmem:[#allocation2] sm:$0xf]
    %v80 = vld [vmem:[%s2] sm:$0x1]
    %v82 = vlaneseq
    %v83 = vshrl.u32 %v82, 7
    %v84 = vsub.s32 0, %v83
    %v85 = vrot.slane %v80, %v84
    %v95 = vunpack.c.l.b16 %v71
    %v96 = vunpack.c.l.b16 %v72
    %v97 = vunpack.c.l.b16 %v73
    %v98 = vunpack.c.l.b16 %v74
    %v99 = vunpack.c.l.b16 %v75
    %v100 = vunpack.c.l.b16 %v76
    %v101 = vunpack.c.l.b16 %v77
    %v102 = vunpack.c.l.b16 %v78
    %v103 = vpack.c.b16 %v96, %v95
    %v104 = vpack.c.b16 %v98, %v97
    %v105 = vpack.c.b16 %v100, %v99
    %v106 = vpack.c.b16 %v102, %v101
    %vm107 = vcmask 64512
    %v109 = vsel %vm107, %v103, 0
    %v112 = vsel %vm107, %v104, 0
    %v115 = vsel %vm107, %v105, 0
    %v118 = vsel %vm107, %v106, 0
    %vm120 = vcmask 1043456
    %v122 = vsel %vm120, %v79, 0
    %124 = vmatprep.subr.bf16.mxu0 0
    %125 = vmatpush1.bf16.msra.mxu0 %v122
    %126 = vmatprep.subr.bf16.mxu0 0
    %127 = vmatpush1.bf16.msra.mxu0 0
    %128 = vmatprep.subr.bf16.mxu0 0
    %129 = vmatpush1.bf16.msra.mxu0 0
    %130 = vmatprep.subr.bf16.mxu0 0
    %131 = vmatpush1.bf16.msra.mxu0 0
    %132 = vmatprep.subr.bf16.mxu0 0
    %133 = vmatpush1.bf16.msra.mxu0 0
    %134 = vmatprep.subr.bf16.mxu0 0
    %135 = vmatpush1.bf16.msra.mxu0 0
    %136 = vmatprep.subr.bf16.mxu0 0
    %137 = vmatpush1.bf16.msra.mxu0 0
    %138 = vmatprep.subr.bf16.mxu0 0
    %139 = vmatpush1.bf16.msra.mxu0 0
    %140 = vmatprep.subr.bf16.mxu0 0
    %141 = vmatpush1.bf16.msra.mxu0 0
    %142 = vmatprep.subr.bf16.mxu0 0
    %143 = vmatpush1.bf16.msra.mxu0 0
    %144 = vmatprep.subr.bf16.mxu0 0
    %145 = vmatpush1.bf16.msra.mxu0 0
    %146 = vmatprep.subr.bf16.mxu0 0
    %147 = vmatpush1.bf16.msra.mxu0 0
    %148 = vmatprep.subr.bf16.mxu0 0
    %149 = vmatpush1.bf16.msra.mxu0 0
    %150 = vmatprep.subr.bf16.mxu0 0
    %151 = vmatpush1.bf16.msra.mxu0 0
    %152 = vmatprep.subr.bf16.mxu0 0
    %153 = vmatpush1.bf16.msra.mxu0 0
    %154 = vmatprep.subr.bf16.mxu0 0
    %155 = vmatpush1.bf16.msra.mxu0 0
    %156 = vmatprep.mubr.bf16.mxu0 0
    %157 = vmatmul.mubr.bf16.gmra.mrb[0].mxu0 %v109
    %v158 = vpop.f32.mrb[0].mxu0
    %v159 = vadd.f32 %v85, %v158
    %v160 = vpop.f32.mrb[0].mxu0
    %v161 = vpop.f32.mrb[0].mxu0
    %v162 = vadd.f32 %v85, %v161
    %v163 = vpop.f32.mrb[0].mxu0
    %164 = vmatprep.mubr.bf16.mxu0 0
    %165 = vmatmul.mubr.bf16.gmra.mrb[0].mxu0 %v112
    %v166 = vpop.f32.mrb[0].mxu0
    %v167 = vadd.f32 %v85, %v166
    %v168 = vpop.f32.mrb[0].mxu0
    %v169 = vpop.f32.mrb[0].mxu0
    %v170 = vadd.f32 %v85, %v169
    %v171 = vpop.f32.mrb[0].mxu0
    %172 = vmatprep.mubr.bf16.mxu0 0
    %173 = vmatmul.mubr.bf16.gmra.mrb[0].mxu0 %v115
    %v174 = vpop.f32.mrb[0].mxu0
    %v175 = vadd.f32 %v85, %v174
    %v176 = vpop.f32.mrb[0].mxu0
    %v177 = vpop.f32.mrb[0].mxu0
    %v178 = vadd.f32 %v85, %v177
    %v179 = vpop.f32.mrb[0].mxu0
    %180 = vmatprep.mubr.bf16.mxu0 0
    %181 = vmatmul.mubr.bf16.gmra.mrb[0].mxu0 %v118
    %v182 = vpop.f32.mrb[0].mxu0
    %v183 = vadd.f32 %v85, %v182
    %v184 = vpop.f32.mrb[0].mxu0
    %v185 = vpop.f32.mrb[0].mxu0
    %v186 = vadd.f32 %v85, %v185
    %v187 = vpop.f32.mrb[0].mxu0
    %188 = vdwg.mxu0
    %v189 = vxor.u32 %v159, 2147483648
    %v190 = vmul.f32 %v189, 1.442695
    %v191 = vpow.pop %v190
    %v192 = vadd.f32 %v191, 1.0
    %v193 = vrcp.pop %v192
    %v194 = vmul.f32 1.0, %v193
    %v195 = vtanh.pop %v159
    %v196 = vmul.f32 %v194, 0.0
    %198 = vrot.lane.b32.xlu0 %v195, 64
    %v199 = vpop.permute.xlu0 %198
    %v201 = vmul.f32 %v194, %v199
    %203 = vrot.lane.b32.xlu0 %v201, 32
    %v204 = vpop.permute.xlu0 %203
    %v206 = vadd.f32 %v196, %v204
    %v207 = vtanh.pop %v206
    %209 = vrot.lane.b32.xlu0 %v207, 64
    %v210 = vpop.permute.xlu0 %209
    %v212 = vmul.f32 %v194, %v210
    %v213 = vpack.c.bf16 %v212, %v212
    %v218 = vunpack.c.l.b16 %v61
    %v219 = vunpack.c.h.b16 %v61
    %v220 = vunpack.c.l.b16 %v62
    %v221 = vunpack.c.h.b16 %v62
    %v222 = vunpack.c.l.b16 %v63
    %v223 = vunpack.c.h.b16 %v63
    %v224 = vunpack.c.l.b16 %v64
    %v225 = vunpack.c.h.b16 %v64
    %v226 = vpack.c.b16 %v220, %v218
    %v227 = vpack.c.b16 %v221, %v219
    %v228 = vpack.c.b16 %v224, %v222
    %v229 = vpack.c.b16 %v225, %v223
    %vm234 = vcmask 261120
    %v236 = vsel %vm234, 0, 0
    %238 = vmatprep.subr.bf16.mxu0 %v227
    %239 = vmatpush1.bf16.msra.mxu0 %v226
    %240 = vmatprep.subr.bf16.mxu0 %v229
    %241 = vmatpush1.bf16.msra.mxu0 %v228
    %242 = vmatprep.subr.bf16.mxu0 0
    %243 = vmatpush1.bf16.msra.mxu0 0
    %244 = vmatprep.subr.bf16.mxu0 0
    %245 = vmatpush1.bf16.msra.mxu0 0
    %246 = vmatprep.subr.bf16.mxu0 0
    %247 = vmatpush1.bf16.msra.mxu0 0
    %248 = vmatprep.subr.bf16.mxu0 0
    %249 = vmatpush1.bf16.msra.mxu0 0
    %250 = vmatprep.subr.bf16.mxu0 0
    %251 = vmatpush1.bf16.msra.mxu0 0
    %252 = vmatprep.subr.bf16.mxu0 0
    %253 = vmatpush1.bf16.msra.mxu0 0
    %254 = vmatprep.subr.bf16.mxu0 0
    %255 = vmatpush1.bf16.msra.mxu0 0
    %256 = vmatprep.subr.bf16.mxu0 0
    %257 = vmatpush1.bf16.msra.mxu0 0
    %258 = vmatprep.subr.bf16.mxu0 0
    %259 = vmatpush1.bf16.msra.mxu0 0
    %260 = vmatprep.subr.bf16.mxu0 0
    %261 = vmatpush1.bf16.msra.mxu0 0
    %262 = vmatprep.subr.bf16.mxu0 0
    %263 = vmatpush1.bf16.msra.mxu0 0
    %264 = vmatprep.subr.bf16.mxu0 0
    %265 = vmatpush1.bf16.msra.mxu0 0
    %266 = vmatprep.subr.bf16.mxu0 0
    %267 = vmatpush1.bf16.msra.mxu0 0
    %268 = vmatprep.subr.bf16.mxu0 0
    %269 = vmatpush1.bf16.msra.mxu0 0
    %270 = vmatprep.mubr.bf16.mxu0 0
    %271 = vmatmul.mubr.bf16.gmra.mrb[0].mxu0 %v236
    %v272 = vpop.f32.mrb[0].mxu0
    %v273 = vadd.f32 0.0, %v272
    %v274 = vpop.f32.mrb[0].mxu0
    %v275 = vadd.f32 0.0, %v274
    %v276 = vpop.f32.mrb[0].mxu0
    %v277 = vpop.f32.mrb[0].mxu0
    %278 = vdwg.mxu0
    %280 = vrot.lane.b32.xlu0 %v213, 32
    %v281 = vpop.permute.xlu0 %280
    %v286 = vunpack.c.l.b16 %v57
    %v287 = vunpack.c.h.b16 %v57
    %v288 = vunpack.c.l.b16 %v58
    %v289 = vunpack.c.h.b16 %v58
    %v290 = vunpack.c.l.b16 %v59
    %v291 = vunpack.c.h.b16 %v59
    %v292 = vunpack.c.l.b16 %v60
    %v293 = vunpack.c.h.b16 %v60
    %v294 = vpack.c.b16 %v288, %v286
    %v295 = vpack.c.b16 %v289, %v287
    %v296 = vpack.c.b16 %v292, %v290
    %v297 = vpack.c.b16 %v293, %v291
    %v303 = vsel %vm234, %v281, 0
    %305 = vmatprep.subr.bf16.mxu0 %v295
    %306 = vmatpush1.bf16.msra.mxu0 %v294
    %307 = vmatprep.subr.bf16.mxu0 %v297
    %308 = vmatpush1.bf16.msra.mxu0 %v296
    %309 = vmatprep.subr.bf16.mxu0 0
    %310 = vmatpush1.bf16.msra.mxu0 0
    %311 = vmatprep.subr.bf16.mxu0 0
    %312 = vmatpush1.bf16.msra.mxu0 0
    %313 = vmatprep.subr.bf16.mxu0 0
    %314 = vmatpush1.bf16.msra.mxu0 0
    %315 = vmatprep.subr.bf16.mxu0 0
    %316 = vmatpush1.bf16.msra.mxu0 0
    %317 = vmatprep.subr.bf16.mxu0 0
    %318 = vmatpush1.bf16.msra.mxu0 0
    %319 = vmatprep.subr.bf16.mxu0 0
    %320 = vmatpush1.bf16.msra.mxu0 0
    %321 = vmatprep.subr.bf16.mxu0 0
    %322 = vmatpush1.bf16.msra.mxu0 0
    %323 = vmatprep.subr.bf16.mxu0 0
    %324 = vmatpush1.bf16.msra.mxu0 0
    %325 = vmatprep.subr.bf16.mxu0 0
    %326 = vmatpush1.bf16.msra.mxu0 0
    %327 = vmatprep.subr.bf16.mxu0 0
    %328 = vmatpush1.bf16.msra.mxu0 0
    %329 = vmatprep.subr.bf16.mxu0 0
    %330 = vmatpush1.bf16.msra.mxu0 0
    %331 = vmatprep.subr.bf16.mxu0 0
    %332 = vmatpush1.bf16.msra.mxu0 0
    %333 = vmatprep.subr.bf16.mxu0 0
    %334 = vmatpush1.bf16.msra.mxu0 0
    %335 = vmatprep.subr.bf16.mxu0 0
    %336 = vmatpush1.bf16.msra.mxu0 0
    %337 = vmatprep.mubr.bf16.mxu0 0
    %338 = vmatmul.mubr.bf16.gmra.mrb[0].mxu0 %v303
    %v339 = vpop.f32.mrb[0].mxu0
    %v340 = vadd.f32 %v273, %v339
    %v341 = vpop.f32.mrb[0].mxu0
    %v342 = vadd.f32 %v275, %v341
    %v343 = vpop.f32.mrb[0].mxu0
    %v344 = vpop.f32.mrb[0].mxu0
    %345 = vdwg.mxu0
    %v347 = vlaneseq
    %v348 = vshrl.u32 %v347, 7
    %v349 = vsub.s32 0, %v348
    %v350 = vrot.slane %v65, %v349
    %v352 = vadd.f32 %v342, %v350
    %v353 = vxor.u32 %v352, 2147483648
    %v354 = vmul.f32 %v353, 1.442695
    %v355 = vpow.pop %v354
    %v356 = vadd.f32 %v355, 1.0
    %v357 = vrcp.pop %v356
    %v358 = vmul.f32 1.0, %v357
    %v359 = vtanh.pop %v352
    %v360 = vmul.f32 %v358, 0.0
    %362 = vrot.lane.b32.xlu0 %v359, 64
    %v363 = vpop.permute.xlu0 %362
    %v365 = vmul.f32 %v358, %v363
    %367 = vrot.lane.b32.xlu0 %v365, 32
    %v368 = vpop.permute.xlu0 %367
    %v370 = vadd.f32 %v360, %v368
    %v371 = vtanh.pop %v370
    %373 = vrot.lane.b32.xlu0 %v371, 64
    %v374 = vpop.permute.xlu0 %373
    %v376 = vmul.f32 %v358, %v374
    %v377 = vadd.f32 %v340, %v162
    %v378 = vxor.u32 %v377, 2147483648
    %v379 = vmul.f32 %v378, 1.442695
    %v380 = vpow.pop %v379
    %v381 = vadd.f32 %v380, 1.0
    %v382 = vrcp.pop %v381
    %v383 = vmul.f32 1.0, %v382
    %v384 = vtanh.pop %v377
    %v385 = vmul.f32 %v383, %v206
    %387 = vrot.lane.b32.xlu0 %v384, 64
    %v388 = vpop.permute.xlu0 %387
    %v390 = vmul.f32 %v383, %v388
    %392 = vrot.lane.b32.xlu0 %v390, 32
    %v393 = vpop.permute.xlu0 %392
    %v395 = vadd.f32 %v385, %v393
    %v396 = vtanh.pop %v395
    %398 = vrot.lane.b32.xlu0 %v396, 64
    %v399 = vpop.permute.xlu0 %398
    %v401 = vmul.f32 %v383, %v399
    %v402 = vpack.c.bf16 %v401, %v401
    %v403 = vpack.c.bf16 %v376, %v376
    %405 = vrot.lane.b32.xlu0 %v403, 32
    %v406 = vpop.permute.xlu0 %405
    %v408 = vsel %vm234, %v406, 0
    %410 = vmatprep.subr.bf16.mxu0 %v227
    %411 = vmatpush1.bf16.msra.mxu0 %v226
    %412 = vmatprep.subr.bf16.mxu0 %v229
    %413 = vmatpush1.bf16.msra.mxu0 %v228
    %414 = vmatprep.subr.bf16.mxu0 0
    %415 = vmatpush1.bf16.msra.mxu0 0
    %416 = vmatprep.subr.bf16.mxu0 0
    %417 = vmatpush1.bf16.msra.mxu0 0
    %418 = vmatprep.subr.bf16.mxu0 0
    %419 = vmatpush1.bf16.msra.mxu0 0
    %420 = vmatprep.subr.bf16.mxu0 0
    %421 = vmatpush1.bf16.msra.mxu0 0
    %422 = vmatprep.subr.bf16.mxu0 0
    %423 = vmatpush1.bf16.msra.mxu0 0
    %424 = vmatprep.subr.bf16.mxu0 0
    %425 = vmatpush1.bf16.msra.mxu0 0
    %426 = vmatprep.subr.bf16.mxu0 0
    %427 = vmatpush1.bf16.msra.mxu0 0
    %428 = vmatprep.subr.bf16.mxu0 0
    %429 = vmatpush1.bf16.msra.mxu0 0
    %430 = vmatprep.subr.bf16.mxu0 0
    %431 = vmatpush1.bf16.msra.mxu0 0
    %432 = vmatprep.subr.bf16.mxu0 0
    %433 = vmatpush1.bf16.msra.mxu0 0
    %434 = vmatprep.subr.bf16.mxu0 0
    %435 = vmatpush1.bf16.msra.mxu0 0
    %436 = vmatprep.subr.bf16.mxu0 0
    %437 = vmatpush1.bf16.msra.mxu0 0
    %438 = vmatprep.subr.bf16.mxu0 0
    %439 = vmatpush1.bf16.msra.mxu0 0
    %440 = vmatprep.subr.bf16.mxu0 0
    %441 = vmatpush1.bf16.msra.mxu0 0
    %442 = vmatprep.mubr.bf16.mxu0 0
    %443 = vmatmul.mubr.bf16.gmra.mrb[0].mxu0 %v408
    %v444 = vpop.f32.mrb[0].mxu0
    %v445 = vadd.f32 0.0, %v444
    %v446 = vpop.f32.mrb[0].mxu0
    %v447 = vadd.f32 0.0, %v446
    %v448 = vpop.f32.mrb[0].mxu0
    %v449 = vpop.f32.mrb[0].mxu0
    %450 = vdwg.mxu0
    %452 = vrot.lane.b32.xlu0 %v402, 32
    %v453 = vpop.permute.xlu0 %452
    %v455 = vsel %vm234, %v453, 0
    %457 = vmatprep.subr.bf16.mxu0 %v295
    %458 = vmatpush1.bf16.msra.mxu0 %v294
    %459 = vmatprep.subr.bf16.mxu0 %v297
    %460 = vmatpush1.bf16.msra.mxu0 %v296
    %461 = vmatprep.subr.bf16.mxu0 0
    %462 = vmatpush1.bf16.msra.mxu0 0
    %463 = vmatprep.subr.bf16.mxu0 0
    %464 = vmatpush1.bf16.msra.mxu0 0
    %465 = vmatprep.subr.bf16.mxu0 0
    %466 = vmatpush1.bf16.msra.mxu0 0
    %467 = vmatprep.subr.bf16.mxu0 0
    %468 = vmatpush1.bf16.msra.mxu0 0
    %469 = vmatprep.subr.bf16.mxu0 0
    %470 = vmatpush1.bf16.msra.mxu0 0
    %471 = vmatprep.subr.bf16.mxu0 0
    %472 = vmatpush1.bf16.msra.mxu0 0
    %473 = vmatprep.subr.bf16.mxu0 0
    %474 = vmatpush1.bf16.msra.mxu0 0
    %475 = vmatprep.subr.bf16.mxu0 0
    %476 = vmatpush1.bf16.msra.mxu0 0
    %477 = vmatprep.subr.bf16.mxu0 0
    %478 = vmatpush1.bf16.msra.mxu0 0
    %479 = vmatprep.subr.bf16.mxu0 0
    %480 = vmatpush1.bf16.msra.mxu0 0
    %481 = vmatprep.subr.bf16.mxu0 0
    %482 = vmatpush1.bf16.msra.mxu0 0
    %483 = vmatprep.subr.bf16.mxu0 0
    %484 = vmatpush1.bf16.msra.mxu0 0
    %485 = vmatprep.subr.bf16.mxu0 0
    %486 = vmatpush1.bf16.msra.mxu0 0
    %487 = vmatprep.subr.bf16.mxu0 0
    %488 = vmatpush1.bf16.msra.mxu0 0
    %489 = vmatprep.mubr.bf16.mxu0 0
    %490 = vmatmul.mubr.bf16.gmra.mrb[0].mxu0 %v455
    %v491 = vpop.f32.mrb[0].mxu0
    %v492 = vadd.f32 %v445, %v491
    %v493 = vpop.f32.mrb[0].mxu0
    %v494 = vadd.f32 %v447, %v493
    %v495 = vpop.f32.mrb[0].mxu0
    %v496 = vpop.f32.mrb[0].mxu0
    %497 = vdwg.mxu0
    %v498 = vadd.f32 %v494, %v350
    %v499 = vxor.u32 %v498, 2147483648
    %v500 = vmul.f32 %v499, 1.442695
    %v501 = vpow.pop %v500
    %v502 = vadd.f32 %v501, 1.0
    %v503 = vrcp.pop %v502
    %v504 = vmul.f32 1.0, %v503
    %v505 = vtanh.pop %v498
    %v506 = vmul.f32 %v504, %v370
    %508 = vrot.lane.b32.xlu0 %v505, 64
    %v509 = vpop.permute.xlu0 %508
    %v511 = vmul.f32 %v504, %v509
    %513 = vrot.lane.b32.xlu0 %v511, 32
    %v514 = vpop.permute.xlu0 %513
    %v516 = vadd.f32 %v506, %v514
    %v517 = vtanh.pop %v516
    %519 = vrot.lane.b32.xlu0 %v517, 64
    %v520 = vpop.permute.xlu0 %519
    %v522 = vmul.f32 %v504, %v520
    %v523 = vadd.f32 %v492, %v167
    %v524 = vxor.u32 %v523, 2147483648
    %v525 = vmul.f32 %v524, 1.442695
    %v526 = vpow.pop %v525
    %v527 = vadd.f32 %v526, 1.0
    %v528 = vrcp.pop %v527
    %v529 = vmul.f32 1.0, %v528
    %v530 = vtanh.pop %v523
    %v531 = vmul.f32 %v529, %v395
    %533 = vrot.lane.b32.xlu0 %v530, 64
    %v534 = vpop.permute.xlu0 %533
    %v536 = vmul.f32 %v529, %v534
    %538 = vrot.lane.b32.xlu0 %v536, 32
    %v539 = vpop.permute.xlu0 %538
    %v541 = vadd.f32 %v531, %v539
    %v542 = vtanh.pop %v541
    %544 = vrot.lane.b32.xlu0 %v542, 64
    %v545 = vpop.permute.xlu0 %544
    %v547 = vmul.f32 %v529, %v545
    %v548 = vpack.c.bf16 %v547, %v547
    %v549 = vpack.c.bf16 %v522, %v522
    %551 = vrot.lane.b32.xlu0 %v549, 32
    %v552 = vpop.permute.xlu0 %551
    %v554 = vsel %vm234, %v552, 0
    %556 = vmatprep.subr.bf16.mxu0 %v227
    %557 = vmatpush1.bf16.msra.mxu0 %v226
    %558 = vmatprep.subr.bf16.mxu0 %v229
    %559 = vmatpush1.bf16.msra.mxu0 %v228
    %560 = vmatprep.subr.bf16.mxu0 0
    %561 = vmatpush1.bf16.msra.mxu0 0
    %562 = vmatprep.subr.bf16.mxu0 0
    %563 = vmatpush1.bf16.msra.mxu0 0
    %564 = vmatprep.subr.bf16.mxu0 0
    %565 = vmatpush1.bf16.msra.mxu0 0
    %566 = vmatprep.subr.bf16.mxu0 0
    %567 = vmatpush1.bf16.msra.mxu0 0
    %568 = vmatprep.subr.bf16.mxu0 0
    %569 = vmatpush1.bf16.msra.mxu0 0
    %570 = vmatprep.subr.bf16.mxu0 0
    %571 = vmatpush1.bf16.msra.mxu0 0
    %572 = vmatprep.subr.bf16.mxu0 0
    %573 = vmatpush1.bf16.msra.mxu0 0
    %574 = vmatprep.subr.bf16.mxu0 0
    %575 = vmatpush1.bf16.msra.mxu0 0
    %576 = vmatprep.subr.bf16.mxu0 0
    %577 = vmatpush1.bf16.msra.mxu0 0
    %578 = vmatprep.subr.bf16.mxu0 0
    %579 = vmatpush1.bf16.msra.mxu0 0
    %580 = vmatprep.subr.bf16.mxu0 0
    %581 = vmatpush1.bf16.msra.mxu0 0
    %582 = vmatprep.subr.bf16.mxu0 0
    %583 = vmatpush1.bf16.msra.mxu0 0
    %584 = vmatprep.subr.bf16.mxu0 0
    %585 = vmatpush1.bf16.msra.mxu0 0
    %586 = vmatprep.subr.bf16.mxu0 0
    %587 = vmatpush1.bf16.msra.mxu0 0
    %588 = vmatprep.mubr.bf16.mxu0 0
    %589 = vmatmul.mubr.bf16.gmra.mrb[0].mxu0 %v554
    %v590 = vpop.f32.mrb[0].mxu0
    %v591 = vadd.f32 0.0, %v590
    %v592 = vpop.f32.mrb[0].mxu0
    %v593 = vadd.f32 0.0, %v592
    %v594 = vpop.f32.mrb[0].mxu0
    %v595 = vpop.f32.mrb[0].mxu0
    %596 = vdwg.mxu0
    %598 = vrot.lane.b32.xlu0 %v548, 32
    %v599 = vpop.permute.xlu0 %598
    %v601 = vsel %vm234, %v599, 0
    %603 = vmatprep.subr.bf16.mxu0 %v295
    %604 = vmatpush1.bf16.msra.mxu0 %v294
    %605 = vmatprep.subr.bf16.mxu0 %v297
    %606 = vmatpush1.bf16.msra.mxu0 %v296
    %607 = vmatprep.subr.bf16.mxu0 0
    %608 = vmatpush1.bf16.msra.mxu0 0
    %609 = vmatprep.subr.bf16.mxu0 0
    %610 = vmatpush1.bf16.msra.mxu0 0
    %611 = vmatprep.subr.bf16.mxu0 0
    %612 = vmatpush1.bf16.msra.mxu0 0
    %613 = vmatprep.subr.bf16.mxu0 0
    %614 = vmatpush1.bf16.msra.mxu0 0
    %615 = vmatprep.subr.bf16.mxu0 0
    %616 = vmatpush1.bf16.msra.mxu0 0
    %617 = vmatprep.subr.bf16.mxu0 0
    %618 = vmatpush1.bf16.msra.mxu0 0
    %619 = vmatprep.subr.bf16.mxu0 0
    %620 = vmatpush1.bf16.msra.mxu0 0
    %621 = vmatprep.subr.bf16.mxu0 0
    %622 = vmatpush1.bf16.msra.mxu0 0
    %623 = vmatprep.subr.bf16.mxu0 0
    %624 = vmatpush1.bf16.msra.mxu0 0
    %625 = vmatprep.subr.bf16.mxu0 0
    %626 = vmatpush1.bf16.msra.mxu0 0
    %627 = vmatprep.subr.bf16.mxu0 0
    %628 = vmatpush1.bf16.msra.mxu0 0
    %629 = vmatprep.subr.bf16.mxu0 0
    %630 = vmatpush1.bf16.msra.mxu0 0
    %631 = vmatprep.subr.bf16.mxu0 0
    %632 = vmatpush1.bf16.msra.mxu0 0
    %633 = vmatprep.subr.bf16.mxu0 0
    %634 = vmatpush1.bf16.msra.mxu0 0
    %635 = vmatprep.mubr.bf16.mxu0 0
    %636 = vmatmul.mubr.bf16.gmra.mrb[0].mxu0 %v601
    %v637 = vpop.f32.mrb[0].mxu0
    %v638 = vadd.f32 %v591, %v637
    %v639 = vpop.f32.mrb[0].mxu0
    %v640 = vadd.f32 %v593, %v639
    %v641 = vpop.f32.mrb[0].mxu0
    %v642 = vpop.f32.mrb[0].mxu0
    %643 = vdwg.mxu0
    %v644 = vadd.f32 %v640, %v350
    %v645 = vxor.u32 %v644, 2147483648
    %v646 = vmul.f32 %v645, 1.442695
    %v647 = vpow.pop %v646
    %v648 = vadd.f32 %v647, 1.0
    %v649 = vrcp.pop %v648
    %v650 = vmul.f32 1.0, %v649
    %v651 = vtanh.pop %v644
    %v652 = vmul.f32 %v650, %v516
    %654 = vrot.lane.b32.xlu0 %v651, 64
    %v655 = vpop.permute.xlu0 %654
    %v657 = vmul.f32 %v650, %v655
    %659 = vrot.lane.b32.xlu0 %v657, 32
    %v660 = vpop.permute.xlu0 %659
    %v662 = vadd.f32 %v652, %v660
    %v663 = vtanh.pop %v662
    %665 = vrot.lane.b32.xlu0 %v663, 64
    %v666 = vpop.permute.xlu0 %665
    %v668 = vmul.f32 %v650, %v666
    %v669 = vadd.f32 %v638, %v170
    %v670 = vxor.u32 %v669, 2147483648
    %v671 = vmul.f32 %v670, 1.442695
    %v672 = vpow.pop %v671
    %v673 = vadd.f32 %v672, 1.0
    %v674 = vrcp.pop %v673
    %v675 = vmul.f32 1.0, %v674
    %v676 = vtanh.pop %v669
    %v677 = vmul.f32 %v675, %v541
    %679 = vrot.lane.b32.xlu0 %v676, 64
    %v680 = vpop.permute.xlu0 %679
    %v682 = vmul.f32 %v675, %v680
    %684 = vrot.lane.b32.xlu0 %v682, 32
    %v685 = vpop.permute.xlu0 %684
    %v687 = vadd.f32 %v677, %v685
    %v688 = vtanh.pop %v687
    %690 = vrot.lane.b32.xlu0 %v688, 64
    %v691 = vpop.permute.xlu0 %690
    %v693 = vmul.f32 %v675, %v691
    %v694 = vpack.c.bf16 %v693, %v693
    %v695 = vpack.c.bf16 %v668, %v668
    %697 = vrot.lane.b32.xlu0 %v695, 32
    %v698 = vpop.permute.xlu0 %697
    %v700 = vsel %vm234, %v698, 0
    %702 = vmatprep.subr.bf16.mxu0 %v227
    %703 = vmatpush1.bf16.msra.mxu0 %v226
    %704 = vmatprep.subr.bf16.mxu0 %v229
    %705 = vmatpush1.bf16.msra.mxu0 %v228
    %706 = vmatprep.subr.bf16.mxu0 0
    %707 = vmatpush1.bf16.msra.mxu0 0
    %708 = vmatprep.subr.bf16.mxu0 0
    %709 = vmatpush1.bf16.msra.mxu0 0
    %710 = vmatprep.subr.bf16.mxu0 0
    %711 = vmatpush1.bf16.msra.mxu0 0
    %712 = vmatprep.subr.bf16.mxu0 0
    %713 = vmatpush1.bf16.msra.mxu0 0
    %714 = vmatprep.subr.bf16.mxu0 0
    %715 = vmatpush1.bf16.msra.mxu0 0
    %716 = vmatprep.subr.bf16.mxu0 0
    %717 = vmatpush1.bf16.msra.mxu0 0
    %718 = vmatprep.subr.bf16.mxu0 0
    %719 = vmatpush1.bf16.msra.mxu0 0
    %720 = vmatprep.subr.bf16.mxu0 0
    %721 = vmatpush1.bf16.msra.mxu0 0
    %722 = vmatprep.subr.bf16.mxu0 0
    %723 = vmatpush1.bf16.msra.mxu0 0
    %724 = vmatprep.subr.bf16.mxu0 0
    %725 = vmatpush1.bf16.msra.mxu0 0
    %726 = vmatprep.subr.bf16.mxu0 0
    %727 = vmatpush1.bf16.msra.mxu0 0
    %728 = vmatprep.subr.bf16.mxu0 0
    %729 = vmatpush1.bf16.msra.mxu0 0
    %730 = vmatprep.subr.bf16.mxu0 0
    %731 = vmatpush1.bf16.msra.mxu0 0
    %732 = vmatprep.subr.bf16.mxu0 0
    %733 = vmatpush1.bf16.msra.mxu0 0
    %734 = vmatprep.mubr.bf16.mxu0 0
    %735 = vmatmul.mubr.bf16.gmra.mrb[0].mxu0 %v700
    %v736 = vpop.f32.mrb[0].mxu0
    %v737 = vadd.f32 0.0, %v736
    %v738 = vpop.f32.mrb[0].mxu0
    %v739 = vadd.f32 0.0, %v738
    %v740 = vpop.f32.mrb[0].mxu0
    %v741 = vpop.f32.mrb[0].mxu0
    %742 = vdwg.mxu0
    %744 = vrot.lane.b32.xlu0 %v694, 32
    %v745 = vpop.permute.xlu0 %744
    %v747 = vsel %vm234, %v745, 0
    %749 = vmatprep.subr.bf16.mxu0 %v295
    %750 = vmatpush1.bf16.msra.mxu0 %v294
    %751 = vmatprep.subr.bf16.mxu0 %v297
    %752 = vmatpush1.bf16.msra.mxu0 %v296
    %753 = vmatprep.subr.bf16.mxu0 0
    %754 = vmatpush1.bf16.msra.mxu0 0
    %755 = vmatprep.subr.bf16.mxu0 0
    %756 = vmatpush1.bf16.msra.mxu0 0
    %757 = vmatprep.subr.bf16.mxu0 0
    %758 = vmatpush1.bf16.msra.mxu0 0
    %759 = vmatprep.subr.bf16.mxu0 0
    %760 = vmatpush1.bf16.msra.mxu0 0
    %761 = vmatprep.subr.bf16.mxu0 0
    %762 = vmatpush1.bf16.msra.mxu0 0
    %763 = vmatprep.subr.bf16.mxu0 0
    %764 = vmatpush1.bf16.msra.mxu0 0
    %765 = vmatprep.subr.bf16.mxu0 0
    %766 = vmatpush1.bf16.msra.mxu0 0
    %767 = vmatprep.subr.bf16.mxu0 0
    %768 = vmatpush1.bf16.msra.mxu0 0
    %769 = vmatprep.subr.bf16.mxu0 0
    %770 = vmatpush1.bf16.msra.mxu0 0
    %771 = vmatprep.subr.bf16.mxu0 0
    %772 = vmatpush1.bf16.msra.mxu0 0
    %773 = vmatprep.subr.bf16.mxu0 0
    %774 = vmatpush1.bf16.msra.mxu0 0
    %775 = vmatprep.subr.bf16.mxu0 0
    %776 = vmatpush1.bf16.msra.mxu0 0
    %777 = vmatprep.subr.bf16.mxu0 0
    %778 = vmatpush1.bf16.msra.mxu0 0
    %779 = vmatprep.subr.bf16.mxu0 0
    %780 = vmatpush1.bf16.msra.mxu0 0
    %781 = vmatprep.mubr.bf16.mxu0 0
    %782 = vmatmul.mubr.bf16.gmra.mrb[0].mxu0 %v747
    %v783 = vpop.f32.mrb[0].mxu0
    %v784 = vadd.f32 %v737, %v783
    %v785 = vpop.f32.mrb[0].mxu0
    %v786 = vadd.f32 %v739, %v785
    %v787 = vpop.f32.mrb[0].mxu0
    %v788 = vpop.f32.mrb[0].mxu0
    %789 = vdwg.mxu0
    %v790 = vadd.f32 %v786, %v350
    %v791 = vxor.u32 %v790, 2147483648
    %v792 = vmul.f32 %v791, 1.442695
    %v793 = vpow.pop %v792
    %v794 = vadd.f32 %v793, 1.0
    %v795 = vrcp.pop %v794
    %v796 = vmul.f32 1.0, %v795
    %v797 = vtanh.pop %v790
    %v798 = vmul.f32 %v796, %v662
    %800 = vrot.lane.b32.xlu0 %v797, 64
    %v801 = vpop.permute.xlu0 %800
    %v803 = vmul.f32 %v796, %v801
    %805 = vrot.lane.b32.xlu0 %v803, 32
    %v806 = vpop.permute.xlu0 %805
    %v808 = vadd.f32 %v798, %v806
    %v809 = vtanh.pop %v808
    %811 = vrot.lane.b32.xlu0 %v809, 64
    %v812 = vpop.permute.xlu0 %811
    %v814 = vmul.f32 %v796, %v812
    %v815 = vadd.f32 %v784, %v175
    %v816 = vxor.u32 %v815, 2147483648
    %v817 = vmul.f32 %v816, 1.442695
    %v818 = vpow.pop %v817
    %v819 = vadd.f32 %v818, 1.0
    %v820 = vrcp.pop %v819
    %v821 = vmul.f32 1.0, %v820
    %v822 = vtanh.pop %v815
    %v823 = vmul.f32 %v821, %v687
    %825 = vrot.lane.b32.xlu0 %v822, 64
    %v826 = vpop.permute.xlu0 %825
    %v828 = vmul.f32 %v821, %v826
    %830 = vrot.lane.b32.xlu0 %v828, 32
    %v831 = vpop.permute.xlu0 %830
    %v833 = vadd.f32 %v823, %v831
    %v834 = vtanh.pop %v833
    %836 = vrot.lane.b32.xlu0 %v834, 64
    %v837 = vpop.permute.xlu0 %836
    %v839 = vmul.f32 %v821, %v837
    %v840 = vpack.c.bf16 %v839, %v839
    %v841 = vpack.c.bf16 %v814, %v814
    %843 = vrot.lane.b32.xlu0 %v841, 32
    %v844 = vpop.permute.xlu0 %843
    %v846 = vsel %vm234, %v844, 0
    %848 = vmatprep.subr.bf16.mxu0 %v227
    %849 = vmatpush1.bf16.msra.mxu0 %v226
    %850 = vmatprep.subr.bf16.mxu0 %v229
    %851 = vmatpush1.bf16.msra.mxu0 %v228
    %852 = vmatprep.subr.bf16.mxu0 0
    %853 = vmatpush1.bf16.msra.mxu0 0
    %854 = vmatprep.subr.bf16.mxu0 0
    %855 = vmatpush1.bf16.msra.mxu0 0
    %856 = vmatprep.subr.bf16.mxu0 0
    %857 = vmatpush1.bf16.msra.mxu0 0
    %858 = vmatprep.subr.bf16.mxu0 0
    %859 = vmatpush1.bf16.msra.mxu0 0
    %860 = vmatprep.subr.bf16.mxu0 0
    %861 = vmatpush1.bf16.msra.mxu0 0
    %862 = vmatprep.subr.bf16.mxu0 0
    %863 = vmatpush1.bf16.msra.mxu0 0
    %864 = vmatprep.subr.bf16.mxu0 0
    %865 = vmatpush1.bf16.msra.mxu0 0
    %866 = vmatprep.subr.bf16.mxu0 0
    %867 = vmatpush1.bf16.msra.mxu0 0
    %868 = vmatprep.subr.bf16.mxu0 0
    %869 = vmatpush1.bf16.msra.mxu0 0
    %870 = vmatprep.subr.bf16.mxu0 0
    %871 = vmatpush1.bf16.msra.mxu0 0
    %872 = vmatprep.subr.bf16.mxu0 0
    %873 = vmatpush1.bf16.msra.mxu0 0
    %874 = vmatprep.subr.bf16.mxu0 0
    %875 = vmatpush1.bf16.msra.mxu0 0
    %876 = vmatprep.subr.bf16.mxu0 0
    %877 = vmatpush1.bf16.msra.mxu0 0
    %878 = vmatprep.subr.bf16.mxu0 0
    %879 = vmatpush1.bf16.msra.mxu0 0
    %880 = vmatprep.mubr.bf16.mxu0 0
    %881 = vmatmul.mubr.bf16.gmra.mrb[0].mxu0 %v846
    %v882 = vpop.f32.mrb[0].mxu0
    %v883 = vadd.f32 0.0, %v882
    %v884 = vpop.f32.mrb[0].mxu0
    %v885 = vadd.f32 0.0, %v884
    %v886 = vpop.f32.mrb[0].mxu0
    %v887 = vpop.f32.mrb[0].mxu0
    %888 = vdwg.mxu0
    %890 = vrot.lane.b32.xlu0 %v840, 32
    %v891 = vpop.permute.xlu0 %890
    %v893 = vsel %vm234, %v891, 0
    %895 = vmatprep.subr.bf16.mxu0 %v295
    %896 = vmatpush1.bf16.msra.mxu0 %v294
    %897 = vmatprep.subr.bf16.mxu0 %v297
    %898 = vmatpush1.bf16.msra.mxu0 %v296
    %899 = vmatprep.subr.bf16.mxu0 0
    %900 = vmatpush1.bf16.msra.mxu0 0
    %901 = vmatprep.subr.bf16.mxu0 0
    %902 = vmatpush1.bf16.msra.mxu0 0
    %903 = vmatprep.subr.bf16.mxu0 0
    %904 = vmatpush1.bf16.msra.mxu0 0
    %905 = vmatprep.subr.bf16.mxu0 0
    %906 = vmatpush1.bf16.msra.mxu0 0
    %907 = vmatprep.subr.bf16.mxu0 0
    %908 = vmatpush1.bf16.msra.mxu0 0
    %909 = vmatprep.subr.bf16.mxu0 0
    %910 = vmatpush1.bf16.msra.mxu0 0
    %911 = vmatprep.subr.bf16.mxu0 0
    %912 = vmatpush1.bf16.msra.mxu0 0
    %913 = vmatprep.subr.bf16.mxu0 0
    %914 = vmatpush1.bf16.msra.mxu0 0
    %915 = vmatprep.subr.bf16.mxu0 0
    %916 = vmatpush1.bf16.msra.mxu0 0
    %917 = vmatprep.subr.bf16.mxu0 0
    %918 = vmatpush1.bf16.msra.mxu0 0
    %919 = vmatprep.subr.bf16.mxu0 0
    %920 = vmatpush1.bf16.msra.mxu0 0
    %921 = vmatprep.subr.bf16.mxu0 0
    %922 = vmatpush1.bf16.msra.mxu0 0
    %923 = vmatprep.subr.bf16.mxu0 0
    %924 = vmatpush1.bf16.msra.mxu0 0
    %925 = vmatprep.subr.bf16.mxu0 0
    %926 = vmatpush1.bf16.msra.mxu0 0
    %927 = vmatprep.mubr.bf16.mxu0 0
    %928 = vmatmul.mubr.bf16.gmra.mrb[0].mxu0 %v893
    %v929 = vpop.f32.mrb[0].mxu0
    %v930 = vadd.f32 %v883, %v929
    %v931 = vpop.f32.mrb[0].mxu0
    %v932 = vadd.f32 %v885, %v931
    %v933 = vpop.f32.mrb[0].mxu0
    %v934 = vpop.f32.mrb[0].mxu0
    %935 = vdwg.mxu0
    %v936 = vadd.f32 %v932, %v350
    %v937 = vxor.u32 %v936, 2147483648
    %v938 = vmul.f32 %v937, 1.442695
    %v939 = vpow.pop %v938
    %v940 = vadd.f32 %v939, 1.0
    %v941 = vrcp.pop %v940
    %v942 = vmul.f32 1.0, %v941
    %v943 = vtanh.pop %v936
    %v944 = vmul.f32 %v942, %v808
    %946 = vrot.lane.b32.xlu0 %v943, 64
    %v947 = vpop.permute.xlu0 %946
    %v949 = vmul.f32 %v942, %v947
    %951 = vrot.lane.b32.xlu0 %v949, 32
    %v952 = vpop.permute.xlu0 %951
    %v954 = vadd.f32 %v944, %v952
    %v955 = vtanh.pop %v954
    %957 = vrot.lane.b32.xlu0 %v955, 64
    %v958 = vpop.permute.xlu0 %957
    %v960 = vmul.f32 %v942, %v958
    %v961 = vadd.f32 %v930, %v178
    %v962 = vxor.u32 %v961, 2147483648
    %v963 = vmul.f32 %v962, 1.442695
    %v964 = vpow.pop %v963
    %v965 = vadd.f32 %v964, 1.0
    %v966 = vrcp.pop %v965
    %v967 = vmul.f32 1.0, %v966
    %v968 = vtanh.pop %v961
    %v969 = vmul.f32 %v967, %v833
    %971 = vrot.lane.b32.xlu0 %v968, 64
    %v972 = vpop.permute.xlu0 %971
    %v974 = vmul.f32 %v967, %v972
    %976 = vrot.lane.b32.xlu0 %v974, 32
    %v977 = vpop.permute.xlu0 %976
    %v979 = vadd.f32 %v969, %v977
    %v980 = vtanh.pop %v979
    %982 = vrot.lane.b32.xlu0 %v980, 64
    %v983 = vpop.permute.xlu0 %982
    %v985 = vmul.f32 %v967, %v983
    %v986 = vpack.c.bf16 %v985, %v985
    %v987 = vpack.c.bf16 %v960, %v960
    %989 = vrot.lane.b32.xlu0 %v987, 32
    %v990 = vpop.permute.xlu0 %989
    %v992 = vsel %vm234, %v990, 0
    %994 = vmatprep.subr.bf16.mxu0 %v227
    %995 = vmatpush1.bf16.msra.mxu0 %v226
    %996 = vmatprep.subr.bf16.mxu0 %v229
    %997 = vmatpush1.bf16.msra.mxu0 %v228
    %998 = vmatprep.subr.bf16.mxu0 0
    %999 = vmatpush1.bf16.msra.mxu0 0
    %1000 = vmatprep.subr.bf16.mxu0 0
    %1001 = vmatpush1.bf16.msra.mxu0 0
    %1002 = vmatprep.subr.bf16.mxu0 0
    %1003 = vmatpush1.bf16.msra.mxu0 0
    %1004 = vmatprep.subr.bf16.mxu0 0
    %1005 = vmatpush1.bf16.msra.mxu0 0
    %1006 = vmatprep.subr.bf16.mxu0 0
    %1007 = vmatpush1.bf16.msra.mxu0 0
    %1008 = vmatprep.subr.bf16.mxu0 0
    %1009 = vmatpush1.bf16.msra.mxu0 0
    %1010 = vmatprep.subr.bf16.mxu0 0
    %1011 = vmatpush1.bf16.msra.mxu0 0
    %1012 = vmatprep.subr.bf16.mxu0 0
    %1013 = vmatpush1.bf16.msra.mxu0 0
    %1014 = vmatprep.subr.bf16.mxu0 0
    %1015 = vmatpush1.bf16.msra.mxu0 0
    %1016 = vmatprep.subr.bf16.mxu0 0
    %1017 = vmatpush1.bf16.msra.mxu0 0
    %1018 = vmatprep.subr.bf16.mxu0 0
    %1019 = vmatpush1.bf16.msra.mxu0 0
    %1020 = vmatprep.subr.bf16.mxu0 0
    %1021 = vmatpush1.bf16.msra.mxu0 0
    %1022 = vmatprep.subr.bf16.mxu0 0
    %1023 = vmatpush1.bf16.msra.mxu0 0
    %1024 = vmatprep.subr.bf16.mxu0 0
    %1025 = vmatpush1.bf16.msra.mxu0 0
    %1026 = vmatprep.mubr.bf16.mxu0 0
    %1027 = vmatmul.mubr.bf16.gmra.mrb[0].mxu0 %v992
    %v1028 = vpop.f32.mrb[0].mxu0
    %v1029 = vadd.f32 0.0, %v1028
    %v1030 = vpop.f32.mrb[0].mxu0
    %v1031 = vadd.f32 0.0, %v1030
    %v1032 = vpop.f32.mrb[0].mxu0
    %v1033 = vpop.f32.mrb[0].mxu0
    %1034 = vdwg.mxu0
    %1036 = vrot.lane.b32.xlu0 %v986, 32
    %v1037 = vpop.permute.xlu0 %1036
    %v1039 = vsel %vm234, %v1037, 0
    %1041 = vmatprep.subr.bf16.mxu0 %v295
    %1042 = vmatpush1.bf16.msra.mxu0 %v294
    %1043 = vmatprep.subr.bf16.mxu0 %v297
    %1044 = vmatpush1.bf16.msra.mxu0 %v296
    %1045 = vmatprep.subr.bf16.mxu0 0
    %1046 = vmatpush1.bf16.msra.mxu0 0
    %1047 = vmatprep.subr.bf16.mxu0 0
    %1048 = vmatpush1.bf16.msra.mxu0 0
    %1049 = vmatprep.subr.bf16.mxu0 0
    %1050 = vmatpush1.bf16.msra.mxu0 0
    %1051 = vmatprep.subr.bf16.mxu0 0
    %1052 = vmatpush1.bf16.msra.mxu0 0
    %1053 = vmatprep.subr.bf16.mxu0 0
    %1054 = vmatpush1.bf16.msra.mxu0 0
    %1055 = vmatprep.subr.bf16.mxu0 0
    %1056 = vmatpush1.bf16.msra.mxu0 0
    %1057 = vmatprep.subr.bf16.mxu0 0
    %1058 = vmatpush1.bf16.msra.mxu0 0
    %1059 = vmatprep.subr.bf16.mxu0 0
    %1060 = vmatpush1.bf16.msra.mxu0 0
    %1061 = vmatprep.subr.bf16.mxu0 0
    %1062 = vmatpush1.bf16.msra.mxu0 0
    %1063 = vmatprep.subr.bf16.mxu0 0
    %1064 = vmatpush1.bf16.msra.mxu0 0
    %1065 = vmatprep.subr.bf16.mxu0 0
    %1066 = vmatpush1.bf16.msra.mxu0 0
    %1067 = vmatprep.subr.bf16.mxu0 0
    %1068 = vmatpush1.bf16.msra.mxu0 0
    %1069 = vmatprep.subr.bf16.mxu0 0
    %1070 = vmatpush1.bf16.msra.mxu0 0
    %1071 = vmatprep.subr.bf16.mxu0 0
    %1072 = vmatpush1.bf16.msra.mxu0 0
    %1073 = vmatprep.mubr.bf16.mxu0 0
    %1074 = vmatmul.mubr.bf16.gmra.mrb[0].mxu0 %v1039
    %v1075 = vpop.f32.mrb[0].mxu0
    %v1076 = vadd.f32 %v1029, %v1075
    %v1077 = vpop.f32.mrb[0].mxu0
    %v1078 = vadd.f32 %v1031, %v1077
    %v1079 = vpop.f32.mrb[0].mxu0
    %v1080 = vpop.f32.mrb[0].mxu0
    %1081 = vdwg.mxu0
    %v1082 = vadd.f32 %v1078, %v350
    %v1083 = vxor.u32 %v1082, 2147483648
    %v1084 = vmul.f32 %v1083, 1.442695
    %v1085 = vpow.pop %v1084
    %v1086 = vadd.f32 %v1085, 1.0
    %v1087 = vrcp.pop %v1086
    %v1088 = vmul.f32 1.0, %v1087
    %v1089 = vtanh.pop %v1082
    %v1090 = vmul.f32 %v1088, %v954
    %1092 = vrot.lane.b32.xlu0 %v1089, 64
    %v1093 = vpop.permute.xlu0 %1092
    %v1095 = vmul.f32 %v1088, %v1093
    %1097 = vrot.lane.b32.xlu0 %v1095, 32
    %v1098 = vpop.permute.xlu0 %1097
    %v1100 = vadd.f32 %v1090, %v1098
    %v1101 = vtanh.pop %v1100
    %1103 = vrot.lane.b32.xlu0 %v1101, 64
    %v1104 = vpop.permute.xlu0 %1103
    %v1106 = vmul.f32 %v1088, %v1104
    %v1107 = vadd.f32 %v1076, %v183
    %v1108 = vxor.u32 %v1107, 2147483648
    %v1109 = vmul.f32 %v1108, 1.442695
    %v1110 = vpow.pop %v1109
    %v1111 = vadd.f32 %v1110, 1.0
    %v1112 = vrcp.pop %v1111
    %v1113 = vmul.f32 1.0, %v1112
    %v1114 = vtanh.pop %v1107
    %v1115 = vmul.f32 %v1113, %v979
    %1117 = vrot.lane.b32.xlu0 %v1114, 64
    %v1118 = vpop.permute.xlu0 %1117
    %v1120 = vmul.f32 %v1113, %v1118
    %1122 = vrot.lane.b32.xlu0 %v1120, 32
    %v1123 = vpop.permute.xlu0 %1122
    %v1125 = vadd.f32 %v1115, %v1123
    %v1126 = vtanh.pop %v1125
    %1128 = vrot.lane.b32.xlu0 %v1126, 64
    %v1129 = vpop.permute.xlu0 %1128
    %v1131 = vmul.f32 %v1113, %v1129
    %v1132 = vpack.c.bf16 %v1131, %v1131
    %v1133 = vpack.c.bf16 %v1106, %v1106
    %1135 = vrot.lane.b32.xlu0 %v1133, 32
    %v1136 = vpop.permute.xlu0 %1135
    %v1138 = vsel %vm234, %v1136, 0
    %1140 = vmatprep.subr.bf16.mxu0 %v227
    %1141 = vmatpush1.bf16.msra.mxu0 %v226
    %1142 = vmatprep.subr.bf16.mxu0 %v229
    %1143 = vmatpush1.bf16.msra.mxu0 %v228
    %1144 = vmatprep.subr.bf16.mxu0 0
    %1145 = vmatpush1.bf16.msra.mxu0 0
    %1146 = vmatprep.subr.bf16.mxu0 0
    %1147 = vmatpush1.bf16.msra.mxu0 0
    %1148 = vmatprep.subr.bf16.mxu0 0
    %1149 = vmatpush1.bf16.msra.mxu0 0
    %1150 = vmatprep.subr.bf16.mxu0 0
    %1151 = vmatpush1.bf16.msra.mxu0 0
    %1152 = vmatprep.subr.bf16.mxu0 0
    %1153 = vmatpush1.bf16.msra.mxu0 0
    %1154 = vmatprep.subr.bf16.mxu0 0
    %1155 = vmatpush1.bf16.msra.mxu0 0
    %1156 = vmatprep.subr.bf16.mxu0 0
    %1157 = vmatpush1.bf16.msra.mxu0 0
    %1158 = vmatprep.subr.bf16.mxu0 0
    %1159 = vmatpush1.bf16.msra.mxu0 0
    %1160 = vmatprep.subr.bf16.mxu0 0
    %1161 = vmatpush1.bf16.msra.mxu0 0
    %1162 = vmatprep.subr.bf16.mxu0 0
    %1163 = vmatpush1.bf16.msra.mxu0 0
    %1164 = vmatprep.subr.bf16.mxu0 0
    %1165 = vmatpush1.bf16.msra.mxu0 0
    %1166 = vmatprep.subr.bf16.mxu0 0
    %1167 = vmatpush1.bf16.msra.mxu0 0
    %1168 = vmatprep.subr.bf16.mxu0 0
    %1169 = vmatpush1.bf16.msra.mxu0 0
    %1170 = vmatprep.subr.bf16.mxu0 0
    %1171 = vmatpush1.bf16.msra.mxu0 0
    %1172 = vmatprep.mubr.bf16.mxu0 0
    %1173 = vmatmul.mubr.bf16.gmra.mrb[0].mxu0 %v1138
    %v1174 = vpop.f32.mrb[0].mxu0
    %v1175 = vadd.f32 0.0, %v1174
    %v1176 = vpop.f32.mrb[0].mxu0
    %v1177 = vadd.f32 0.0, %v1176
    %v1178 = vpop.f32.mrb[0].mxu0
    %v1179 = vpop.f32.mrb[0].mxu0
    %1180 = vdwg.mxu0
    %1182 = vrot.lane.b32.xlu0 %v1132, 32
    %v1183 = vpop.permute.xlu0 %1182
    %v1185 = vsel %vm234, %v1183, 0
    %1187 = vmatprep.subr.bf16.mxu0 %v295
    %1188 = vmatpush1.bf16.msra.mxu0 %v294
    %1189 = vmatprep.subr.bf16.mxu0 %v297
    %1190 = vmatpush1.bf16.msra.mxu0 %v296
    %1191 = vmatprep.subr.bf16.mxu0 0
    %1192 = vmatpush1.bf16.msra.mxu0 0
    %1193 = vmatprep.subr.bf16.mxu0 0
    %1194 = vmatpush1.bf16.msra.mxu0 0
    %1195 = vmatprep.subr.bf16.mxu0 0
    %1196 = vmatpush1.bf16.msra.mxu0 0
    %1197 = vmatprep.subr.bf16.mxu0 0
    %1198 = vmatpush1.bf16.msra.mxu0 0
    %1199 = vmatprep.subr.bf16.mxu0 0
    %1200 = vmatpush1.bf16.msra.mxu0 0
    %1201 = vmatprep.subr.bf16.mxu0 0
    %1202 = vmatpush1.bf16.msra.mxu0 0
    %1203 = vmatprep.subr.bf16.mxu0 0
    %1204 = vmatpush1.bf16.msra.mxu0 0
    %1205 = vmatprep.subr.bf16.mxu0 0
    %1206 = vmatpush1.bf16.msra.mxu0 0
    %1207 = vmatprep.subr.bf16.mxu0 0
    %1208 = vmatpush1.bf16.msra.mxu0 0
    %1209 = vmatprep.subr.bf16.mxu0 0
    %1210 = vmatpush1.bf16.msra.mxu0 0
    %1211 = vmatprep.subr.bf16.mxu0 0
    %1212 = vmatpush1.bf16.msra.mxu0 0
    %1213 = vmatprep.subr.bf16.mxu0 0
    %1214 = vmatpush1.bf16.msra.mxu0 0
    %1215 = vmatprep.subr.bf16.mxu0 0
    %1216 = vmatpush1.bf16.msra.mxu0 0
    %1217 = vmatprep.subr.bf16.mxu0 0
    %1218 = vmatpush1.bf16.msra.mxu0 0
    %1219 = vmatprep.mubr.bf16.mxu0 0
    %1220 = vmatmul.mubr.bf16.gmra.mrb[0].mxu0 %v1185
    %v1221 = vpop.f32.mrb[0].mxu0
    %v1222 = vadd.f32 %v1175, %v1221
    %v1223 = vpop.f32.mrb[0].mxu0
    %v1224 = vadd.f32 %v1177, %v1223
    %v1225 = vpop.f32.mrb[0].mxu0
    %v1226 = vpop.f32.mrb[0].mxu0
    %1227 = vdwg.mxu0
    %v1228 = vadd.f32 %v1224, %v350
    %v1229 = vxor.u32 %v1228, 2147483648
    %v1230 = vmul.f32 %v1229, 1.442695
    %v1231 = vpow.pop %v1230
    %v1232 = vadd.f32 %v1231, 1.0
    %v1233 = vrcp.pop %v1232
    %v1234 = vmul.f32 1.0, %v1233
    %v1235 = vtanh.pop %v1228
    %v1236 = vmul.f32 %v1234, %v1100
    %1238 = vrot.lane.b32.xlu0 %v1235, 64
    %v1239 = vpop.permute.xlu0 %1238
    %v1241 = vmul.f32 %v1234, %v1239
    %1243 = vrot.lane.b32.xlu0 %v1241, 32
    %v1244 = vpop.permute.xlu0 %1243
    %v1246 = vadd.f32 %v1236, %v1244
    %v1247 = vtanh.pop %v1246
    %1249 = vrot.lane.b32.xlu0 %v1247, 64
    %v1250 = vpop.permute.xlu0 %1249
    %v1252 = vmul.f32 %v1234, %v1250
    %v1253 = vadd.f32 %v1222, %v186
    %v1254 = vxor.u32 %v1253, 2147483648
    %v1255 = vmul.f32 %v1254, 1.442695
    %v1256 = vpow.pop %v1255
    %v1257 = vadd.f32 %v1256, 1.0
    %v1258 = vrcp.pop %v1257
    %v1259 = vmul.f32 1.0, %v1258
    %v1260 = vtanh.pop %v1253
    %v1261 = vmul.f32 %v1259, %v1125
    %1263 = vrot.lane.b32.xlu0 %v1260, 64
    %v1264 = vpop.permute.xlu0 %1263
    %v1266 = vmul.f32 %v1259, %v1264
    %1268 = vrot.lane.b32.xlu0 %v1266, 32
    %v1269 = vpop.permute.xlu0 %1268
    %v1271 = vadd.f32 %v1261, %v1269
    %v1272 = vtanh.pop %v1271
    %1274 = vrot.lane.b32.xlu0 %v1272, 64
    %v1275 = vpop.permute.xlu0 %1274
    %v1277 = vmul.f32 %v1259, %v1275
    %v1278 = vpack.c.bf16 %v1277, %v1277
    %v1279 = vpack.c.bf16 %v1252, %v1252
    %1281 = vrot.lane.b32.xlu0 %v1279, 32
    %v1282 = vpop.permute.xlu0 %1281
    %v1284 = vsel %vm234, %v1282, 0
    %1286 = vmatprep.subr.bf16.mxu0 %v227
    %1287 = vmatpush1.bf16.msra.mxu0 %v226
    %1288 = vmatprep.subr.bf16.mxu0 %v229
    %1289 = vmatpush1.bf16.msra.mxu0 %v228
    %1290 = vmatprep.subr.bf16.mxu0 0
    %1291 = vmatpush1.bf16.msra.mxu0 0
    %1292 = vmatprep.subr.bf16.mxu0 0
    %1293 = vmatpush1.bf16.msra.mxu0 0
    %1294 = vmatprep.subr.bf16.mxu0 0
    %1295 = vmatpush1.bf16.msra.mxu0 0
    %1296 = vmatprep.subr.bf16.mxu0 0
    %1297 = vmatpush1.bf16.msra.mxu0 0
    %1298 = vmatprep.subr.bf16.mxu0 0
    %1299 = vmatpush1.bf16.msra.mxu0 0
    %1300 = vmatprep.subr.bf16.mxu0 0
    %1301 = vmatpush1.bf16.msra.mxu0 0
    %1302 = vmatprep.subr.bf16.mxu0 0
    %1303 = vmatpush1.bf16.msra.mxu0 0
    %1304 = vmatprep.subr.bf16.mxu0 0
    %1305 = vmatpush1.bf16.msra.mxu0 0
    %1306 = vmatprep.subr.bf16.mxu0 0
    %1307 = vmatpush1.bf16.msra.mxu0 0
    %1308 = vmatprep.subr.bf16.mxu0 0
    %1309 = vmatpush1.bf16.msra.mxu0 0
    %1310 = vmatprep.subr.bf16.mxu0 0
    %1311 = vmatpush1.bf16.msra.mxu0 0
    %1312 = vmatprep.subr.bf16.mxu0 0
    %1313 = vmatpush1.bf16.msra.mxu0 0
    %1314 = vmatprep.subr.bf16.mxu0 0
    %1315 = vmatpush1.bf16.msra.mxu0 0
    %1316 = vmatprep.subr.bf16.mxu0 0
    %1317 = vmatpush1.bf16.msra.mxu0 0
    %1318 = vmatprep.mubr.bf16.mxu0 0
    %1319 = vmatmul.mubr.bf16.gmra.mrb[0].mxu0 %v1284
    %v1320 = vpop.f32.mrb[0].mxu0
    %v1321 = vpop.f32.mrb[0].mxu0
    %v1322 = vadd.f32 0.0, %v1321
    %v1323 = vpop.f32.mrb[0].mxu0
    %v1324 = vpop.f32.mrb[0].mxu0
    %1325 = vdwg.mxu0
    %1327 = vrot.lane.b32.xlu0 %v1278, 32
    %v1328 = vpop.permute.xlu0 %1327
    %v1330 = vsel %vm234, %v1328, 0
    %1332 = vmatprep.subr.bf16.mxu0 %v295
    %1333 = vmatpush1.bf16.msra.mxu0 %v294
    %1334 = vmatprep.subr.bf16.mxu0 %v297
    %1335 = vmatpush1.bf16.msra.mxu0 %v296
    %1336 = vmatprep.subr.bf16.mxu0 0
    %1337 = vmatpush1.bf16.msra.mxu0 0
    %1338 = vmatprep.subr.bf16.mxu0 0
    %1339 = vmatpush1.bf16.msra.mxu0 0
    %1340 = vmatprep.subr.bf16.mxu0 0
    %1341 = vmatpush1.bf16.msra.mxu0 0
    %1342 = vmatprep.subr.bf16.mxu0 0
    %1343 = vmatpush1.bf16.msra.mxu0 0
    %1344 = vmatprep.subr.bf16.mxu0 0
    %1345 = vmatpush1.bf16.msra.mxu0 0
    %1346 = vmatprep.subr.bf16.mxu0 0
    %1347 = vmatpush1.bf16.msra.mxu0 0
    %1348 = vmatprep.subr.bf16.mxu0 0
    %1349 = vmatpush1.bf16.msra.mxu0 0
    %1350 = vmatprep.subr.bf16.mxu0 0
    %1351 = vmatpush1.bf16.msra.mxu0 0
    %1352 = vmatprep.subr.bf16.mxu0 0
    %1353 = vmatpush1.bf16.msra.mxu0 0
    %1354 = vmatprep.subr.bf16.mxu0 0
    %1355 = vmatpush1.bf16.msra.mxu0 0
    %1356 = vmatprep.subr.bf16.mxu0 0
    %1357 = vmatpush1.bf16.msra.mxu0 0
    %1358 = vmatprep.subr.bf16.mxu0 0
    %1359 = vmatpush1.bf16.msra.mxu0 0
    %1360 = vmatprep.subr.bf16.mxu0 0
    %1361 = vmatpush1.bf16.msra.mxu0 0
    %1362 = vmatprep.subr.bf16.mxu0 0
    %1363 = vmatpush1.bf16.msra.mxu0 0
    %1364 = vmatprep.mubr.bf16.mxu0 0
    %1365 = vmatmul.mubr.bf16.gmra.mrb[0].mxu0 %v1330
    %v1366 = vpop.f32.mrb[0].mxu0
    %v1367 = vpop.f32.mrb[0].mxu0
    %v1368 = vadd.f32 %v1322, %v1367
    %v1369 = vpop.f32.mrb[0].mxu0
    %v1370 = vpop.f32.mrb[0].mxu0
    %1371 = vdwg.mxu0
    %v1372 = vadd.f32 %v1368, %v350
    %v1373 = vxor.u32 %v1372, 2147483648
    %v1374 = vmul.f32 %v1373, 1.442695
    %v1375 = vpow.pop %v1374
    %v1376 = vadd.f32 %v1375, 1.0
    %v1377 = vrcp.pop %v1376
    %v1378 = vmul.f32 1.0, %v1377
    %v1379 = vtanh.pop %v1372
    %v1380 = vmul.f32 %v1378, %v1246
    %1382 = vrot.lane.b32.xlu0 %v1379, 64
    %v1383 = vpop.permute.xlu0 %1382
    %v1385 = vmul.f32 %v1378, %v1383
    %1387 = vrot.lane.b32.xlu0 %v1385, 32
    %v1388 = vpop.permute.xlu0 %1387
    %v1390 = vadd.f32 %v1380, %v1388
    %v1391 = vtanh.pop %v1390
    %1393 = vrot.lane.b32.xlu0 %v1391, 64
    %v1394 = vpop.permute.xlu0 %1393
    %v1396 = vmul.f32 %v1378, %v1394
    %v1397 = vpack.c.bf16 %v1396, %v1396
    %v1399 = vlaneseq
    %v1400 = vshrl.u32 %v1399, 7
    %v1401 = vsub.s32 0, %v1400
    %v1402 = vrot.slane %v70, %v1401
    %1405 = vrot.lane.b32.xlu0 %v1397, 32
    %v1406 = vpop.permute.xlu0 %1405
    %v1411 = vunpack.c.l.b16 %v66
    %v1412 = vunpack.c.l.b16 %v67
    %v1413 = vunpack.c.l.b16 %v68
    %v1414 = vunpack.c.l.b16 %v69
    %v1415 = vpack.c.b16 %v1412, %v1411
    %v1416 = vpack.c.b16 %v1414, %v1413
    %v1420 = vsel %vm234, %v1406, 0
    %1422 = vmatprep.subr.bf16.mxu0 0
    %1423 = vmatpush1.bf16.msra.mxu0 %v1415
    %1424 = vmatprep.subr.bf16.mxu0 0
    %1425 = vmatpush1.bf16.msra.mxu0 %v1416
    %1426 = vmatprep.subr.bf16.mxu0 0
    %1427 = vmatpush1.bf16.msra.mxu0 0
    %1428 = vmatprep.subr.bf16.mxu0 0
    %1429 = vmatpush1.bf16.msra.mxu0 0
    %1430 = vmatprep.subr.bf16.mxu0 0
    %1431 = vmatpush1.bf16.msra.mxu0 0
    %1432 = vmatprep.subr.bf16.mxu0 0
    %1433 = vmatpush1.bf16.msra.mxu0 0
    %1434 = vmatprep.subr.bf16.mxu0 0
    %1435 = vmatpush1.bf16.msra.mxu0 0
    %1436 = vmatprep.subr.bf16.mxu0 0
    %1437 = vmatpush1.bf16.msra.mxu0 0
    %1438 = vmatprep.subr.bf16.mxu0 0
    %1439 = vmatpush1.bf16.msra.mxu0 0
    %1440 = vmatprep.subr.bf16.mxu0 0
    %1441 = vmatpush1.bf16.msra.mxu0 0
    %1442 = vmatprep.subr.bf16.mxu0 0
    %1443 = vmatpush1.bf16.msra.mxu0 0
    %1444 = vmatprep.subr.bf16.mxu0 0
    %1445 = vmatpush1.bf16.msra.mxu0 0
    %1446 = vmatprep.subr.bf16.mxu0 0
    %1447 = vmatpush1.bf16.msra.mxu0 0
    %1448 = vmatprep.subr.bf16.mxu0 0
    %1449 = vmatpush1.bf16.msra.mxu0 0
    %1450 = vmatprep.subr.bf16.mxu0 0
    %1451 = vmatpush1.bf16.msra.mxu0 0
    %1452 = vmatprep.subr.bf16.mxu0 0
    %1453 = vmatpush1.bf16.msra.mxu0 0
    %1454 = vmatprep.mubr.bf16.mxu0 0
    %1455 = vmatmul.mubr.bf16.gmra.mrb[0].mxu0 %v1420
    %v1456 = vpop.f32.mrb[0].mxu0
    %v1457 = vadd.f32 %v1402, %v1456
    %v1458 = vpop.f32.mrb[0].mxu0
    %v1459 = vpop.f32.mrb[0].mxu0
    %v1460 = vpop.f32.mrb[0].mxu0
    %1461 = vdwg.mxu0
    %1462 = vst [vmem:[#allocation7] sm:$0xff] %v1457
    // Predicated region
    $region42: #{tpu_custom_call.1} parent=1 // pred_check
      _
    $region43: #{tpu_custom_call.1} parent=1 // pred_check_branch
      %1464 = sbr.rel (0) target = $region45
    $region44: #{tpu_custom_call.1} parent=1 // pred_region
      %s1466 = ssub.s32 128, 128
      %1467 = vsyncadd [#allocation4], %s1466
      %s1469 = sshll.u32 [#allocation7], 4
      %s1470 = int_to_ptr.vmem [resolvable:$true] %s1469
      %1472 = dma.vmem_to_hbm [thread:$0]  %s1470, 128, %s8, [#allocation4]
    $region45: #{tpu_custom_call.1} parent=1 // pred_fallthru
      _
    // Predicated region
    $region46: #{tpu_custom_call.1} parent=1 // pred_check
      _
    $region47: #{tpu_custom_call.1} parent=1 // pred_check_branch
      %1474 = sbr.rel (0) target = $region49
    $region48: #{tpu_custom_call.1} parent=1 // pred_region
      %1475 = dma.done [#allocation4], 128
    $region49: #{tpu_custom_call.1} parent=1 // pred_fallthru
      _
    %1476 = vsyncpa [#allocation3], 1
    %1477 = vsyncpa [#allocation6], 1
    %1478 = vsyncpa [#allocation4], 1

</llo_original>
